<compile_context>
chip_gen: v7x
topology: tpu7x:2x2x1
jax: 0.10.0
libtpu: 0.0.40
codegen_flags: <defaults>
</compile_context>

<pallas_src>
import math
from functools import partial

import numpy as np
import jax
import jax.numpy as jnp
from jax import lax
from jax.experimental import pallas as pl
from jax.experimental.pallas import tpu as pltpu

# ----------------------------- configuration --------------------------------
IMG_SIZE = (256, 256)
NUM_CLASSES = 4
BBOX_ATTRS = 5 + NUM_CLASSES
ANCHORS = np.array(
    [[10, 13], [16, 30], [33, 23],
     [30, 61], [62, 45], [59, 119],
     [116, 90], [156, 198], [373, 326]], dtype=np.float32)
NUM_ANCHORS = ANCHORS.shape[0]
NUM = NUM_ANCHORS // 3          # anchors per scale (3)
IGNORE_THRESHOLD = 0.5
LABEL_SMOOTH = 1.0              # as in the reference module
BCE_EPS = 1e-7
FEATURE_LENGTH = [IMG_SIZE[0] // 32, IMG_SIZE[0] // 16, IMG_SIZE[0] // 8]

TB = 8                          # images per batch tile (fills the 8 sublanes)


def _pick_lane_chunk(L):
    """Lane-chunk size: largest multiple-of-128 divisor of L that is <= 512
    (keeps the live vreg set well under 64), preferring >= 2 chunks so the grid
    has >= 2 parallel steps (uses both TensorCores on v7x)."""
    if L % 128 != 0:
        return L                      # full-width block (equals the array dim)
    for c in range(min(512, L), 127, -128):
        if L % c == 0 and (c < L or L == 128):
            return c
    return L


# ------------------------------- Pallas kernel -------------------------------
def _make_conf_kernel(MAXT, LC, HW, in_w, anchors_sel):
    """Kernel: per-cell weighted objectness BCE for one (batch-tile, lane-chunk)."""
    n_anchor = len(anchors_sel)
    inv_hw = 1.0 / float(HW)          # exact (HW is a power of two)
    inv_w = 1.0 / float(in_w)         # exact (in_w is a power of two)
    valid_col = 4 * MAXT

    def kernel(gt_ref, predk_ref, mask_ref, out_ref):
        ck = pl.program_id(1)

        zx = predk_ref[0]             # (TB, LC) x logits
        zy = predk_ref[1]             # y logits
        zw = predk_ref[2]             # w logits
        zh = predk_ref[3]             # h logits
        zc = predk_ref[4]             # objectness logits
        M = mask_ref[...]             # (TB, LC) {0,1} target / object mask
        G = gt_ref[...]               # (TB, 4*MAXT + 1) GT boxes + valid flag

        # absolute flattened index of each lane: f = anchor*HW + (gj*in_w + gi)
        f = ck * LC + lax.broadcasted_iota(jnp.int32, (TB, LC), 1)
        f_f = f.astype(jnp.float32)
        a_f = jnp.floor(f_f * inv_hw)                 # anchor index (exact)
        lin = f_f - a_f * float(HW)                   # cell index   (exact)
        gy = jnp.floor(lin * inv_w)                   # grid row     (exact)
        gx = lin - gy * float(in_w)                   # grid col     (exact)

        # per-anchor width/height baked in as compile-time constants
        aw = jnp.float32(anchors_sel[n_anchor - 1][0])
        ah = jnp.float32(anchors_sel[n_anchor - 1][1])
        for a in range(n_anchor - 2, -1, -1):
            aw = jnp.where(a_f == float(a), jnp.float32(anchors_sel[a][0]), aw)
            ah = jnp.where(a_f == float(a), jnp.float32(anchors_sel[a][1]), ah)

        # box decode (full slab, lane dense)
        px = jax.nn.sigmoid(zx) + gx
        py = jax.nn.sigmoid(zy) + gy
        pw = jnp.exp(zw) * aw
        ph = jnp.exp(zh) * ah
        p_x1 = px - 0.5 * pw
        p_x2 = px + 0.5 * pw
        p_y1 = py - 0.5 * ph
        p_y2 = py + 0.5 * ph
        p_area = pw * ph

        # ignore-IoU vs. every GT box, vectorized over the whole batch tile.
        # Padded GT rows are all-zero -> IoU == 0 -> never exceed the threshold.
        iou_max = jnp.zeros((TB, LC), jnp.float32)
        for t in range(MAXT):                      # fixed (bucketed) trip count
            gxc = G[:, 4 * t + 0:4 * t + 1]        # (TB, 1) columns, broadcast
            gyc = G[:, 4 * t + 1:4 * t + 2]
            gwc = G[:, 4 * t + 2:4 * t + 3]
            ghc = G[:, 4 * t + 3:4 * t + 4]
            iw = jnp.maximum(
                jnp.minimum(p_x2, gxc + 0.5 * gwc)
                - jnp.maximum(p_x1, gxc - 0.5 * gwc), 0.0)
            ih = jnp.maximum(
                jnp.minimum(p_y2, gyc + 0.5 * ghc)
                - jnp.maximum(p_y1, gyc - 0.5 * ghc), 0.0)
            inter = iw * ih
            union = gwc * ghc + p_area - inter     # > 0 (p_area > 0)
            iou_max = jnp.maximum(iou_max, inter / union)   # exact division

        valid = G[:, valid_col:valid_col + 1]      # (TB, 1): 0 for padded images
        # noobj_init == 1 - mask (set together in get_target)
        noobj = jnp.where(iou_max > IGNORE_THRESHOLD, 0.0, valid * (1.0 - M))

        # objectness BCE, exactly as the torch reference (clamped sigmoid)
        s = jnp.clip(jax.nn.sigmoid(zc), BCE_EPS, 1.0 - BCE_EPS)
        bce = -M * jnp.log(s) - (1.0 - M) * jnp.log(1.0 - s)

        # lane-dense store of the per-cell weighted BCE; host-side jnp.sum
        # finishes the reduction (mask and noobj contributions simply add).
        out_ref[...] = bce * (M + noobj)

    return kernel


def _conf_pallas(predk, mask_flat, gt_blk, *, in_w, in_h, anchors_sel, maxt):
    """predk: (5, bs_pad, NUM*HW)  mask_flat: (bs_pad, NUM*HW)
    gt_blk: (bs_pad, 4*maxt + 1) with GT boxes in grid units + valid flag."""
    c5, bs_pad, L = predk.shape
    HW = in_h * in_w
    num_btiles = bs_pad // TB
    LC = _pick_lane_chunk(L)
    n_chunks = L // LC
    GTW = gt_blk.shape[1]
    kernel = _make_conf_kernel(maxt, LC, HW, in_w, anchors_sel)
    return pl.pallas_call(
        kernel,
        out_shape=jax.ShapeDtypeStruct((bs_pad, L), jnp.float32),
        grid=(num_btiles, n_chunks),
        in_specs=[
            pl.BlockSpec((TB, GTW), lambda bt, ck: (bt, 0)),         # GT + valid
            pl.BlockSpec((c5, TB, LC), lambda bt, ck: (0, bt, ck)),  # pred ch 0..4
            pl.BlockSpec((TB, LC), lambda bt, ck: (bt, ck)),         # object mask
        ],
        out_specs=pl.BlockSpec((TB, LC), lambda bt, ck: (bt, ck)),   # weighted BCE
        compiler_params=pltpu.CompilerParams(
            dimension_semantics=("parallel", "parallel")),
    )(gt_blk, predk, mask_flat)


@partial(jax.jit, static_argnames=("bs", "in_w", "in_h", "anchors", "maxt"))
def _conf_loss_device(x, mask_flat, gt_blk, *, bs, in_w, in_h, anchors, maxt):
    """Device side: channel slice / transpose / pad of the head output, the
    Pallas kernel, and the final reduction.  Returns a device scalar."""
    HW = in_h * in_w
    L = NUM * HW
    bs_pad = mask_flat.shape[0]
    pred = x.reshape(bs, NUM, BBOX_ATTRS, HW)
    predk = jnp.transpose(pred[:, :, :5, :], (2, 0, 1, 3)).reshape(5, bs, L)
    if bs_pad > bs:
        predk = jnp.pad(predk, ((0, 0), (0, bs_pad - bs), (0, 0)))
    wbce = _conf_pallas(predk, mask_flat, gt_blk, in_w=in_w, in_h=in_h,
                        anchors_sel=anchors, maxt=maxt)
    return jnp.sum(wbce) / bs


# ----------------------- sparse (masked-cell) loss helpers -------------------
def _ciou_jnp(px, py, pw, ph, tx, ty, tw, th):
    p_x1 = px - 0.5 * pw; p_x2 = px + 0.5 * pw
    p_y1 = py - 0.5 * ph; p_y2 = py + 0.5 * ph
    t_x1 = tx - 0.5 * tw; t_x2 = tx + 0.5 * tw
    t_y1 = ty - 0.5 * th; t_y2 = ty + 0.5 * th
    iw = jnp.maximum(jnp.minimum(p_x2, t_x2) - jnp.maximum(p_x1, t_x1), 0.0)
    ih = jnp.maximum(jnp.minimum(p_y2, t_y2) - jnp.maximum(p_y1, t_y1), 0.0)
    inter = iw * ih
    union = pw * ph + tw * th - inter
    iou = inter / jnp.maximum(union, 1e-6)
    center = (px - tx) ** 2 + (py - ty) ** 2
    ew = jnp.maximum(jnp.maximum(p_x2, t_x2) - jnp.minimum(p_x1, t_x1), 0.0)
    eh = jnp.maximum(jnp.maximum(p_y2, t_y2) - jnp.minimum(p_y1, t_y1), 0.0)
    diag = ew * ew + eh * eh
    ciou = iou - center / jnp.maximum(diag, 1e-6)
    v = (4.0 / math.pi ** 2) * (jnp.arctan(pw / jnp.maximum(ph, 1e-6))
                                - jnp.arctan(tw / jnp.maximum(th, 1e-6))) ** 2
    alpha = v / jnp.maximum(1.0 - iou + v, 1e-6)
    return ciou - alpha * v


# -------------------------- host-side target assignment ----------------------
def calculate_iou_np(box_a, box_b):
    a_x1 = box_a[:, 0] - box_a[:, 2] / 2; a_x2 = box_a[:, 0] + box_a[:, 2] / 2
    a_y1 = box_a[:, 1] - box_a[:, 3] / 2; a_y2 = box_a[:, 1] + box_a[:, 3] / 2
    b_x1 = box_b[:, 0] - box_b[:, 2] / 2; b_x2 = box_b[:, 0] + box_b[:, 2] / 2
    b_y1 = box_b[:, 1] - box_b[:, 3] / 2; b_y2 = box_b[:, 1] + box_b[:, 3] / 2
    ix1 = np.maximum(a_x1[:, None], b_x1[None, :])
    iy1 = np.maximum(a_y1[:, None], b_y1[None, :])
    ix2 = np.minimum(a_x2[:, None], b_x2[None, :])
    iy2 = np.minimum(a_y2[:, None], b_y2[None, :])
    iw = np.clip(ix2 - ix1, 0.0, None); ih = np.clip(iy2 - iy1, 0.0, None)
    inter = iw * ih
    area_a = ((a_x2 - a_x1) * (a_y2 - a_y1))[:, None]
    area_b = ((b_x2 - b_x1) * (b_y2 - b_y1))[None, :]
    return inter / (area_a + area_b - inter)


def get_target_np(targets, scaled_anchors, in_w, in_h):
    # NumPy port of YOLOLoss.get_target (tiny, data-dependent scatter -> host glue).
    bs = len(targets)
    scale = FEATURE_LENGTH.index(in_w)
    anchor_index = [[0, 1, 2], [3, 4, 5], [6, 7, 8]][scale]
    subtract_index = [0, 3, 6][scale]
    shape = (bs, NUM, in_h, in_w)
    mask = np.zeros(shape, np.float32)
    noobj = np.ones(shape, np.float32)
    tx = np.zeros(shape, np.float32); ty = np.zeros(shape, np.float32)
    tw = np.zeros(shape, np.float32); th = np.zeros(shape, np.float32)
    blsx = np.zeros(shape, np.float32); blsy = np.zeros(shape, np.float32)
    for b in range(bs):
        t = np.asarray(targets[b], np.float32).reshape(-1, 5)
        if t.shape[0] == 0:
            continue
        gxs = t[:, 0] * in_w; gys = t[:, 1] * in_h
        gws = t[:, 2] * in_w; ghs = t[:, 3] * in_h
        gis = np.floor(gxs).astype(np.int64); gjs = np.floor(gys).astype(np.int64)
        gt_box = np.stack([np.zeros_like(gws), np.zeros_like(ghs), gws, ghs], axis=1)
        anchor_shapes = np.concatenate(
            [np.zeros((NUM_ANCHORS, 2), np.float32),
             np.asarray(scaled_anchors, np.float32)], axis=1)
        anch_ious = calculate_iou_np(gt_box, anchor_shapes)
        best_ns = np.argmax(anch_ious, axis=-1)
        for i, best_n in enumerate(best_ns):
            if int(best_n) not in anchor_index:
                continue
            gi, gj = int(gis[i]), int(gjs[i])
            if gj < in_h and gi < in_w:
                bn = int(best_n) - subtract_index
                noobj[b, bn, gj, gi] = 0.0
                mask[b, bn, gj, gi] = 1.0
                tx[b, bn, gj, gi] = gxs[i]; ty[b, bn, gj, gi] = gys[i]
                tw[b, bn, gj, gi] = gws[i]; th[b, bn, gj, gi] = ghs[i]
                blsx[b, bn, gj, gi] = t[i, 2]; blsy[b, bn, gj, gi] = t[i, 3]
    return mask, noobj, tx, ty, tw, th, blsx, blsy


# --------------------------------- forward -----------------------------------
def yolo_loss_forward(x, targets):
    """x: jnp/np array (bs, NUM*BBOX_ATTRS, in_h, in_w).  targets: list of (n,5)
    arrays (cx, cy, w, h normalized + class id).  Returns device scalars."""
    x = jnp.asarray(x, jnp.float32)
    bs, _, in_h, in_w = x.shape
    hw = in_h * in_w
    # in-kernel grid/anchor derivation uses exact power-of-two float math
    assert (in_w & (in_w - 1)) == 0 and (in_h & (in_h - 1)) == 0
    # TODO(synk): non-power-of-two feature maps would need gx/gy/anchor tables.

    stride_h = IMG_SIZE[1] / in_h
    stride_w = IMG_SIZE[0] / in_w
    scaled_anchors = ANCHORS / np.array([stride_w, stride_h], np.float32)
    scale = FEATURE_LENGTH.index(in_w)
    anchor_index = [[0, 1, 2], [3, 4, 5], [6, 7, 8]][scale]
    sel_anchors = scaled_anchors[anchor_index].astype(np.float32)      # (NUM, 2)
    anchors_tup = tuple((float(w), float(h)) for w, h in sel_anchors)

    # host-side data-dependent GT -> anchor/cell assignment (tiny scatter)
    mask, _noobj0, tx, ty, tw, th, blsx, blsy = get_target_np(
        targets, scaled_anchors, in_w, in_h)

    # GT boxes (grid units) for the ignore-IoU; MAXT bucketed -> stable shapes
    tlist = [np.asarray(t, np.float32).reshape(-1, 5) for t in targets]
    maxt_raw = max((t.shape[0] for t in tlist), default=0)
    maxt = max(8, -(-maxt_raw // 8) * 8)
    bs_pad = -(-bs // TB) * TB
    L = NUM * hw
    GTW = 4 * maxt + 1                     # last column = image-valid flag
    gt_blk = np.zeros((bs_pad, GTW), np.float32)
    for b, t in enumerate(tlist):
        gt_blk[b, 4 * maxt] = 1.0
        for i in range(min(t.shape[0], maxt)):
            gt_blk[b, 4 * i:4 * i + 4] = (t[i, 0] * in_w, t[i, 1] * in_h,
                                          t[i, 2] * in_w, t[i, 3] * in_h)
    mask_flat = np.zeros((bs_pad, L), np.float32)
    mask_flat[:bs] = mask.reshape(bs, L)

    loss_conf = _conf_loss_device(
        x, jnp.asarray(mask_flat), jnp.asarray(gt_blk),
        bs=bs, in_w=in_w, in_h=in_h, anchors=anchors_tup, maxt=maxt)

    # ---- sparse class / localisation losses (only the <= few masked cells) ----
    sel = np.argwhere(mask > 0.5)
    if sel.shape[0] == 0:
        loss_cls = jnp.float32(0.0)
        loss_loc = jnp.float32(0.0)
    else:
        b_i = sel[:, 0].astype(np.int32); a_i = sel[:, 1].astype(np.int32)
        j_i = sel[:, 2].astype(np.int32); i_i = sel[:, 3].astype(np.int32)
        flat = (j_i * in_w + i_i).astype(np.int32)
        pred_dev = x.reshape(bs, NUM, BBOX_ATTRS, hw)
        logits = pred_dev[b_i, a_i, :, flat]                    # (n_sel, ATTRS)
        t_x = jnp.asarray(tx[b_i, a_i, j_i, i_i])
        t_y = jnp.asarray(ty[b_i, a_i, j_i, i_i])
        t_w = jnp.asarray(tw[b_i, a_i, j_i, i_i])
        t_h = jnp.asarray(th[b_i, a_i, j_i, i_i])
        bls = jnp.asarray((2.0 - blsx[b_i, a_i, j_i, i_i]
                           * blsy[b_i, a_i, j_i, i_i]).astype(np.float32))
        anc_w = jnp.asarray(sel_anchors[a_i, 0])
        anc_h = jnp.asarray(sel_anchors[a_i, 1])

        p_x = jax.nn.sigmoid(logits[:, 0]) + jnp.asarray(i_i.astype(np.float32))
        p_y = jax.nn.sigmoid(logits[:, 1]) + jnp.asarray(j_i.astype(np.float32))
        p_w = jnp.exp(logits[:, 2]) * anc_w
        p_h = jnp.exp(logits[:, 3]) * anc_h
        ciou = _ciou_jnp(p_x, p_y, p_w, p_h, t_x, t_y, t_w, t_h)
        loss_loc = jnp.sum((1.0 - ciou) * bls) / bs

        cls_p = jnp.clip(jax.nn.sigmoid(logits[:, 5:]), BCE_EPS, 1.0 - BCE_EPS)
        smooth = LABEL_SMOOTH / NUM_CLASSES   # label_smooth == 1 -> constant target
        bce_cls = -smooth * jnp.log(cls_p) - (1.0 - smooth) * jnp.log(1.0 - cls_p)
        loss_cls = jnp.sum(bce_cls) / bs

    total = loss_conf + loss_cls + loss_loc
    return total, loss_conf, loss_cls, loss_loc


# ---------------------- dense NumPy reference (original math) ----------------
def _bce_np(p, t):
    pc = np.clip(p, BCE_EPS, 1.0 - BCE_EPS)
    return -t * np.log(pc) - (1.0 - t) * np.log(1.0 - pc)


def yolo_loss_reference_np(x_np, targets):
    x_np = np.asarray(x_np, np.float32)
    bs, _, in_h, in_w = x_np.shape
    hw = in_h * in_w
    stride_h = IMG_SIZE[1] / in_h
    stride_w = IMG_SIZE[0] / in_w
    scaled_anchors = ANCHORS / np.array([stride_w, stride_h], np.float32)
    scale = FEATURE_LENGTH.index(in_w)
    sel_anchors = scaled_anchors[[[0, 1, 2], [3, 4, 5], [6, 7, 8]][scale]].astype(np.float32)
    pred = np.ascontiguousarray(x_np.reshape(bs, NUM, BBOX_ATTRS, hw))
    mask, noobj0, tx, ty, tw, th, blsx, blsy = get_target_np(
        targets, scaled_anchors, in_w, in_h)
    tlist = [np.asarray(t, np.float32).reshape(-1, 5) for t in targets]

    sig = lambda z: 1.0 / (1.0 + np.exp(-z))
    xx = sig(pred[:, :, 0]); yy = sig(pred[:, :, 1])
    ww = pred[:, :, 2]; hh = pred[:, :, 3]
    conf = sig(pred[:, :, 4]); pcls = sig(pred[:, :, 5:])
    gx = np.tile(np.arange(in_w, dtype=np.float32), in_h)[None, None, :]
    gy = np.repeat(np.arange(in_h, dtype=np.float32), in_w)[None, None, :]
    aw = sel_anchors[:, 0].reshape(1, NUM, 1)
    ah = sel_anchors[:, 1].reshape(1, NUM, 1)
    px = xx + gx; py = yy + gy
    pw = np.exp(ww) * aw; ph = np.exp(hh) * ah

    mask_f = mask.reshape(bs, NUM, hw).astype(np.float32)
    noobj = noobj0.reshape(bs, NUM, hw).astype(np.float32).copy()
    for b in range(bs):
        t = tlist[b]
        if t.shape[0] == 0:
            continue
        iou_max = np.zeros((NUM, hw), np.float32)
        for k in range(t.shape[0]):
            gxc, gyc = t[k, 0] * in_w, t[k, 1] * in_h
            gwc, ghc = t[k, 2] * in_w, t[k, 3] * in_h
            iw = np.clip(np.minimum(px[b] + pw[b] / 2, gxc + gwc / 2)
                         - np.maximum(px[b] - pw[b] / 2, gxc - gwc / 2), 0.0, None)
            ih = np.clip(np.minimum(py[b] + ph[b] / 2, gyc + ghc / 2)
                         - np.maximum(py[b] - ph[b] / 2, gyc - ghc / 2), 0.0, None)
            inter = iw * ih
            union = gwc * ghc + pw[b] * ph[b] - inter
            iou_max = np.maximum(iou_max, inter / union)
        noobj[b] = np.where(iou_max > IGNORE_THRESHOLD, 0.0, noobj[b])

    bc = _bce_np(conf, mask_f)
    loss_conf = float(np.sum(bc * mask_f) / bs + np.sum(bc * noobj) / bs)

    smooth = LABEL_SMOOTH / NUM_CLASSES
    loss_cls = float(np.sum(_bce_np(pcls, smooth) * mask_f[:, :, None, :]) / bs)

    txf = tx.reshape(bs, NUM, hw); tyf = ty.reshape(bs, NUM, hw)
    twf = tw.reshape(bs, NUM, hw); thf = th.reshape(bs, NUM, hw)
    blsf = 2.0 - blsx.reshape(bs, NUM, hw) * blsy.reshape(bs, NUM, hw)
    p_x1 = px - pw / 2; p_x2 = px + pw / 2
    p_y1 = py - ph / 2; p_y2 = py + ph / 2
    t_x1 = txf - twf / 2; t_x2 = txf + twf / 2
    t_y1 = tyf - thf / 2; t_y2 = tyf + thf / 2
    iw = np.clip(np.minimum(p_x2, t_x2) - np.maximum(p_x1, t_x1), 0.0, None)
    ih = np.clip(np.minimum(p_y2, t_y2) - np.maximum(p_y1, t_y1), 0.0, None)
    inter = iw * ih
    union = pw * ph + twf * thf - inter
    iou = inter / np.maximum(union, 1e-6)
    center = (px - txf) ** 2 + (py - tyf) ** 2
    ew = np.clip(np.maximum(p_x2, t_x2) - np.minimum(p_x1, t_x1), 0.0, None)
    eh = np.clip(np.maximum(p_y2, t_y2) - np.minimum(p_y1, t_y1), 0.0, None)
    diag = ew * ew + eh * eh
    ciou = iou - center / np.maximum(diag, 1e-6)
    v = (4.0 / math.pi ** 2) * (np.arctan(pw / np.maximum(ph, 1e-6))
                                - np.arctan(twf / np.maximum(thf, 1e-6))) ** 2
    alpha = v / np.maximum(1.0 - iou + v, 1e-6)
    ciou = ciou - alpha * v
    loss_loc = float(np.sum((1.0 - ciou) * blsf * mask_f) / bs)
    return loss_conf, loss_cls, loss_loc


if __name__ == "__main__":
    key = jax.random.PRNGKey(0)
    bs, in_h, in_w = 2, 16, 16
    kx, kt = jax.random.split(key)
    x = jax.random.normal(kx, (bs, NUM * BBOX_ATTRS, in_h, in_w), jnp.float32)

    # targets: per-image arrays of (n, 5) = (cx, cy, w, h) normalized + class id
    targets = []
    for b, n in enumerate((3, 2)):
        kb = jax.random.fold_in(kt, b)
        ka, kw, kc = jax.random.split(kb, 3)
        xy = jax.random.uniform(ka, (n, 2), minval=0.1, maxval=0.9)
        wh = jax.random.uniform(kw, (n, 2), minval=0.08, maxval=0.35)
        cls = jax.random.randint(kc, (n, 1), 0, NUM_CLASSES).astype(jnp.float32)
        targets.append(np.asarray(jnp.concatenate([xy, wh, cls], axis=1), np.float32))

    total, loss_conf, loss_cls, loss_loc = yolo_loss_forward(x, targets)
    total = jax.block_until_ready(total)

    # validate against a dense NumPy reference of the original PyTorch math
    ref_conf, ref_cls, ref_loc = yolo_loss_reference_np(np.asarray(x), targets)
    got = np.array([float(loss_conf), float(loss_cls), float(loss_loc)], np.float64)
    ref = np.array([ref_conf, ref_cls, ref_loc], np.float64)
    assert np.all(np.isfinite(got)), got
    assert np.allclose(got, ref, rtol=2e-3, atol=2e-2), (got, ref)
    assert np.isfinite(float(total))
    print("KERNEL_OK")
</pallas_src>

<mosaic_0001>
module attributes {stable_mosaic.version = 11 : i64} {
  func.func @kernel(%arg0: i32, %arg1: i32, %arg2: memref<8x33xf32, #tpu.memory_space<vmem>>, %arg3: memref<5x8x384xf32, #tpu.memory_space<vmem>>, %arg4: memref<8x384xf32, #tpu.memory_space<vmem>>, %arg5: memref<8x384xf32, #tpu.memory_space<vmem>>) attributes {dimension_semantics = [#tpu.dimension_semantics<parallel>, #tpu.dimension_semantics<parallel>], iteration_bounds = array<i64: 1, 2>, scalar_prefetch = 0 : i64, scratch_operands = 0 : i64, tpu.core_type = #tpu.core_type<tc>, window_params = [{transform_indices = @transform_0, window_bounds = array<i64: 8, 33>}, {transform_indices = @transform_1, window_bounds = array<i64: 5, 8, 384>}, {transform_indices = @transform_2, window_bounds = array<i64: 8, 384>}, {transform_indices = @transform_3, window_bounds = array<i64: 8, 384>}]} {
    %c0 = arith.constant 0 : index
    %c0_0 = arith.constant 0 : index
    %c0_1 = arith.constant 0 : index
    %0 = vector.load %arg3[%c0, %c0_0, %c0_1] : memref<5x8x384xf32, #tpu.memory_space<vmem>>, vector<1x8x384xf32>
    %1 = vector.shape_cast %0 : vector<1x8x384xf32> to vector<8x384xf32>
    %c1 = arith.constant 1 : index
    %c0_2 = arith.constant 0 : index
    %c0_3 = arith.constant 0 : index
    %2 = vector.load %arg3[%c1, %c0_2, %c0_3] : memref<5x8x384xf32, #tpu.memory_space<vmem>>, vector<1x8x384xf32>
    %3 = vector.shape_cast %2 : vector<1x8x384xf32> to vector<8x384xf32>
    %c2 = arith.constant 2 : index
    %c0_4 = arith.constant 0 : index
    %c0_5 = arith.constant 0 : index
    %4 = vector.load %arg3[%c2, %c0_4, %c0_5] : memref<5x8x384xf32, #tpu.memory_space<vmem>>, vector<1x8x384xf32>
    %5 = vector.shape_cast %4 : vector<1x8x384xf32> to vector<8x384xf32>
    %c3 = arith.constant 3 : index
    %c0_6 = arith.constant 0 : index
    %c0_7 = arith.constant 0 : index
    %6 = vector.load %arg3[%c3, %c0_6, %c0_7] : memref<5x8x384xf32, #tpu.memory_space<vmem>>, vector<1x8x384xf32>
    %7 = vector.shape_cast %6 : vector<1x8x384xf32> to vector<8x384xf32>
    %c4 = arith.constant 4 : index
    %c0_8 = arith.constant 0 : index
    %c0_9 = arith.constant 0 : index
    %8 = vector.load %arg3[%c4, %c0_8, %c0_9] : memref<5x8x384xf32, #tpu.memory_space<vmem>>, vector<1x8x384xf32>
    %9 = vector.shape_cast %8 : vector<1x8x384xf32> to vector<8x384xf32>
    %c0_10 = arith.constant 0 : index
    %c0_11 = arith.constant 0 : index
    %10 = vector.load %arg4[%c0_10, %c0_11] : memref<8x384xf32, #tpu.memory_space<vmem>>, vector<8x384xf32>
    %c0_12 = arith.constant 0 : index
    %c0_13 = arith.constant 0 : index
    %11 = vector.load %arg2[%c0_12, %c0_13] : memref<8x33xf32, #tpu.memory_space<vmem>>, vector<8x33xf32>
    %c384_i32 = arith.constant 384 : i32
    %12 = arith.muli %arg1, %c384_i32 : i32
    %13 = tpu.iota {dimensions = array<i32: 1>} : vector<8x384xi32>
    %14 = vector.broadcast %12 : i32 to vector<8x384xi32>
    %15 = arith.addi %14, %13 : vector<8x384xi32>
    %16 = arith.sitofp %15 : vector<8x384xi32> to vector<8x384xf32>
    %cst = arith.constant 3.906250e-03 : f32
    %17 = vector.broadcast %cst : f32 to vector<8x384xf32>
    %18 = arith.mulf %16, %17 : vector<8x384xf32>
    %19 = math.floor %18 : vector<8x384xf32>
    %cst_14 = arith.constant 2.560000e+02 : f32
    %20 = vector.broadcast %cst_14 : f32 to vector<8x384xf32>
    %21 = arith.mulf %19, %20 : vector<8x384xf32>
    %22 = arith.subf %16, %21 : vector<8x384xf32>
    %cst_15 = arith.constant 6.250000e-02 : f32
    %23 = vector.broadcast %cst_15 : f32 to vector<8x384xf32>
    %24 = arith.mulf %22, %23 : vector<8x384xf32>
    %25 = math.floor %24 : vector<8x384xf32>
    %cst_16 = arith.constant 1.600000e+01 : f32
    %26 = vector.broadcast %cst_16 : f32 to vector<8x384xf32>
    %27 = arith.mulf %25, %26 : vector<8x384xf32>
    %28 = arith.subf %22, %27 : vector<8x384xf32>
    %cst_17 = arith.constant 1.000000e+00 : f32
    %29 = vector.broadcast %cst_17 : f32 to vector<8x384xf32>
    %30 = arith.cmpf oeq, %19, %29 : vector<8x384xf32>
    %cst_18 = arith.constant 3.875000e+00 : f32
    %cst_19 = arith.constant 3.687500e+00 : f32
    %31 = vector.broadcast %cst_18 : f32 to vector<8x384xf32>
    %32 = vector.broadcast %cst_19 : f32 to vector<8x384xf32>
    %33 = arith.select %30, %31, %32 : vector<8x384xi1>, vector<8x384xf32>
    %cst_20 = arith.constant 1.000000e+00 : f32
    %34 = vector.broadcast %cst_20 : f32 to vector<8x384xf32>
    %35 = arith.cmpf oeq, %19, %34 : vector<8x384xf32>
    %cst_21 = arith.constant 2.812500e+00 : f32
    %cst_22 = arith.constant 7.437500e+00 : f32
    %36 = vector.broadcast %cst_21 : f32 to vector<8x384xf32>
    %37 = vector.broadcast %cst_22 : f32 to vector<8x384xf32>
    %38 = arith.select %35, %36, %37 : vector<8x384xi1>, vector<8x384xf32>
    %cst_23 = arith.constant 0.000000e+00 : f32
    %39 = vector.broadcast %cst_23 : f32 to vector<8x384xf32>
    %40 = arith.cmpf oeq, %19, %39 : vector<8x384xf32>
    %cst_24 = arith.constant 1.875000e+00 : f32
    %41 = vector.broadcast %cst_24 : f32 to vector<8x384xf32>
    %42 = arith.select %40, %41, %33 : vector<8x384xi1>, vector<8x384xf32>
    %cst_25 = arith.constant 0.000000e+00 : f32
    %43 = vector.broadcast %cst_25 : f32 to vector<8x384xf32>
    %44 = arith.cmpf oeq, %19, %43 : vector<8x384xf32>
    %cst_26 = arith.constant 3.812500e+00 : f32
    %45 = vector.broadcast %cst_26 : f32 to vector<8x384xf32>
    %46 = arith.select %44, %45, %38 : vector<8x384xi1>, vector<8x384xf32>
    %47 = arith.negf %1 : vector<8x384xf32>
    %48 = math.exp %47 : vector<8x384xf32>
    %cst_27 = arith.constant 1.000000e+00 : f32
    %49 = vector.broadcast %cst_27 : f32 to vector<8x384xf32>
    %50 = arith.addf %49, %48 : vector<8x384xf32>
    %51 = arith.divf %49, %50 : vector<8x384xf32>
    %52 = arith.addf %51, %28 : vector<8x384xf32>
    %53 = arith.negf %3 : vector<8x384xf32>
    %54 = math.exp %53 : vector<8x384xf32>
    %cst_28 = arith.constant 1.000000e+00 : f32
    %55 = vector.broadcast %cst_28 : f32 to vector<8x384xf32>
    %56 = arith.addf %55, %54 : vector<8x384xf32>
    %57 = arith.divf %55, %56 : vector<8x384xf32>
    %58 = arith.addf %57, %25 : vector<8x384xf32>
    %59 = math.exp %5 : vector<8x384xf32>
    %60 = arith.mulf %59, %42 : vector<8x384xf32>
    %61 = math.exp %7 : vector<8x384xf32>
    %62 = arith.mulf %61, %46 : vector<8x384xf32>
    %cst_29 = arith.constant 5.000000e-01 : f32
    %63 = vector.broadcast %cst_29 : f32 to vector<8x384xf32>
    %64 = arith.mulf %63, %60 : vector<8x384xf32>
    %65 = arith.subf %52, %64 : vector<8x384xf32>
    %cst_30 = arith.constant 5.000000e-01 : f32
    %66 = vector.broadcast %cst_30 : f32 to vector<8x384xf32>
    %67 = arith.mulf %66, %60 : vector<8x384xf32>
    %68 = arith.addf %52, %67 : vector<8x384xf32>
    %cst_31 = arith.constant 5.000000e-01 : f32
    %69 = vector.broadcast %cst_31 : f32 to vector<8x384xf32>
    %70 = arith.mulf %69, %62 : vector<8x384xf32>
    %71 = arith.subf %58, %70 : vector<8x384xf32>
    %cst_32 = arith.constant 5.000000e-01 : f32
    %72 = vector.broadcast %cst_32 : f32 to vector<8x384xf32>
    %73 = arith.mulf %72, %62 : vector<8x384xf32>
    %74 = arith.addf %58, %73 : vector<8x384xf32>
    %75 = arith.mulf %60, %62 : vector<8x384xf32>
    %cst_33 = arith.constant 0.000000e+00 : f32
    %76 = vector.broadcast %cst_33 : f32 to vector<8x384xf32>
    %77 = vector.extract_strided_slice %11 {offsets = [0, 0], sizes = [8, 1], strides = [1, 1]} : vector<8x33xf32> to vector<8x1xf32>
    %78 = vector.extract_strided_slice %11 {offsets = [0, 1], sizes = [8, 1], strides = [1, 1]} : vector<8x33xf32> to vector<8x1xf32>
    %79 = vector.extract_strided_slice %11 {offsets = [0, 2], sizes = [8, 1], strides = [1, 1]} : vector<8x33xf32> to vector<8x1xf32>
    %80 = vector.extract_strided_slice %11 {offsets = [0, 3], sizes = [8, 1], strides = [1, 1]} : vector<8x33xf32> to vector<8x1xf32>
    %cst_34 = arith.constant 5.000000e-01 : f32
    %81 = vector.broadcast %cst_34 : f32 to vector<8x1xf32>
    %82 = arith.mulf %81, %79 : vector<8x1xf32>
    %83 = arith.addf %77, %82 : vector<8x1xf32>
    %84 = vector.broadcast %83 : vector<8x1xf32> to vector<8x384xf32>
    %85 = arith.minimumf %68, %84 : vector<8x384xf32>
    %cst_35 = arith.constant 5.000000e-01 : f32
    %86 = vector.broadcast %cst_35 : f32 to vector<8x1xf32>
    %87 = arith.mulf %86, %79 : vector<8x1xf32>
    %88 = arith.subf %77, %87 : vector<8x1xf32>
    %89 = vector.broadcast %88 : vector<8x1xf32> to vector<8x384xf32>
    %90 = arith.maximumf %65, %89 : vector<8x384xf32>
    %91 = arith.subf %85, %90 : vector<8x384xf32>
    %cst_36 = arith.constant 0.000000e+00 : f32
    %92 = vector.broadcast %cst_36 : f32 to vector<8x384xf32>
    %93 = arith.maximumf %91, %92 : vector<8x384xf32>
    %cst_37 = arith.constant 5.000000e-01 : f32
    %94 = vector.broadcast %cst_37 : f32 to vector<8x1xf32>
    %95 = arith.mulf %94, %80 : vector<8x1xf32>
    %96 = arith.addf %78, %95 : vector<8x1xf32>
    %97 = vector.broadcast %96 : vector<8x1xf32> to vector<8x384xf32>
    %98 = arith.minimumf %74, %97 : vector<8x384xf32>
    %cst_38 = arith.constant 5.000000e-01 : f32
    %99 = vector.broadcast %cst_38 : f32 to vector<8x1xf32>
    %100 = arith.mulf %99, %80 : vector<8x1xf32>
    %101 = arith.subf %78, %100 : vector<8x1xf32>
    %102 = vector.broadcast %101 : vector<8x1xf32> to vector<8x384xf32>
    %103 = arith.maximumf %71, %102 : vector<8x384xf32>
    %104 = arith.subf %98, %103 : vector<8x384xf32>
    %cst_39 = arith.constant 0.000000e+00 : f32
    %105 = vector.broadcast %cst_39 : f32 to vector<8x384xf32>
    %106 = arith.maximumf %104, %105 : vector<8x384xf32>
    %107 = arith.mulf %93, %106 : vector<8x384xf32>
    %108 = arith.mulf %79, %80 : vector<8x1xf32>
    %109 = vector.broadcast %108 : vector<8x1xf32> to vector<8x384xf32>
    %110 = arith.addf %109, %75 : vector<8x384xf32>
    %111 = arith.subf %110, %107 : vector<8x384xf32>
    %112 = arith.divf %107, %111 : vector<8x384xf32>
    %113 = arith.maximumf %76, %112 : vector<8x384xf32>
    %114 = vector.extract_strided_slice %11 {offsets = [0, 4], sizes = [8, 1], strides = [1, 1]} : vector<8x33xf32> to vector<8x1xf32>
    %115 = vector.extract_strided_slice %11 {offsets = [0, 5], sizes = [8, 1], strides = [1, 1]} : vector<8x33xf32> to vector<8x1xf32>
    %116 = vector.extract_strided_slice %11 {offsets = [0, 6], sizes = [8, 1], strides = [1, 1]} : vector<8x33xf32> to vector<8x1xf32>
    %117 = vector.extract_strided_slice %11 {offsets = [0, 7], sizes = [8, 1], strides = [1, 1]} : vector<8x33xf32> to vector<8x1xf32>
    %cst_40 = arith.constant 5.000000e-01 : f32
    %118 = vector.broadcast %cst_40 : f32 to vector<8x1xf32>
    %119 = arith.mulf %118, %116 : vector<8x1xf32>
    %120 = arith.addf %114, %119 : vector<8x1xf32>
    %121 = vector.broadcast %120 : vector<8x1xf32> to vector<8x384xf32>
    %122 = arith.minimumf %68, %121 : vector<8x384xf32>
    %cst_41 = arith.constant 5.000000e-01 : f32
    %123 = vector.broadcast %cst_41 : f32 to vector<8x1xf32>
    %124 = arith.mulf %123, %116 : vector<8x1xf32>
    %125 = arith.subf %114, %124 : vector<8x1xf32>
    %126 = vector.broadcast %125 : vector<8x1xf32> to vector<8x384xf32>
    %127 = arith.maximumf %65, %126 : vector<8x384xf32>
    %128 = arith.subf %122, %127 : vector<8x384xf32>
    %cst_42 = arith.constant 0.000000e+00 : f32
    %129 = vector.broadcast %cst_42 : f32 to vector<8x384xf32>
    %130 = arith.maximumf %128, %129 : vector<8x384xf32>
    %cst_43 = arith.constant 5.000000e-01 : f32
    %131 = vector.broadcast %cst_43 : f32 to vector<8x1xf32>
    %132 = arith.mulf %131, %117 : vector<8x1xf32>
    %133 = arith.addf %115, %132 : vector<8x1xf32>
    %134 = vector.broadcast %133 : vector<8x1xf32> to vector<8x384xf32>
    %135 = arith.minimumf %74, %134 : vector<8x384xf32>
    %cst_44 = arith.constant 5.000000e-01 : f32
    %136 = vector.broadcast %cst_44 : f32 to vector<8x1xf32>
    %137 = arith.mulf %136, %117 : vector<8x1xf32>
    %138 = arith.subf %115, %137 : vector<8x1xf32>
    %139 = vector.broadcast %138 : vector<8x1xf32> to vector<8x384xf32>
    %140 = arith.maximumf %71, %139 : vector<8x384xf32>
    %141 = arith.subf %135, %140 : vector<8x384xf32>
    %cst_45 = arith.constant 0.000000e+00 : f32
    %142 = vector.broadcast %cst_45 : f32 to vector<8x384xf32>
    %143 = arith.maximumf %141, %142 : vector<8x384xf32>
    %144 = arith.mulf %130, %143 : vector<8x384xf32>
    %145 = arith.mulf %116, %117 : vector<8x1xf32>
    %146 = vector.broadcast %145 : vector<8x1xf32> to vector<8x384xf32>
    %147 = arith.addf %146, %75 : vector<8x384xf32>
    %148 = arith.subf %147, %144 : vector<8x384xf32>
    %149 = arith.divf %144, %148 : vector<8x384xf32>
    %150 = arith.maximumf %113, %149 : vector<8x384xf32>
    %151 = vector.extract_strided_slice %11 {offsets = [0, 8], sizes = [8, 1], strides = [1, 1]} : vector<8x33xf32> to vector<8x1xf32>
    %152 = vector.extract_strided_slice %11 {offsets = [0, 9], sizes = [8, 1], strides = [1, 1]} : vector<8x33xf32> to vector<8x1xf32>
    %153 = vector.extract_strided_slice %11 {offsets = [0, 10], sizes = [8, 1], strides = [1, 1]} : vector<8x33xf32> to vector<8x1xf32>
    %154 = vector.extract_strided_slice %11 {offsets = [0, 11], sizes = [8, 1], strides = [1, 1]} : vector<8x33xf32> to vector<8x1xf32>
    %cst_46 = arith.constant 5.000000e-01 : f32
    %155 = vector.broadcast %cst_46 : f32 to vector<8x1xf32>
    %156 = arith.mulf %155, %153 : vector<8x1xf32>
    %157 = arith.addf %151, %156 : vector<8x1xf32>
    %158 = vector.broadcast %157 : vector<8x1xf32> to vector<8x384xf32>
    %159 = arith.minimumf %68, %158 : vector<8x384xf32>
    %cst_47 = arith.constant 5.000000e-01 : f32
    %160 = vector.broadcast %cst_47 : f32 to vector<8x1xf32>
    %161 = arith.mulf %160, %153 : vector<8x1xf32>
    %162 = arith.subf %151, %161 : vector<8x1xf32>
    %163 = vector.broadcast %162 : vector<8x1xf32> to vector<8x384xf32>
    %164 = arith.maximumf %65, %163 : vector<8x384xf32>
    %165 = arith.subf %159, %164 : vector<8x384xf32>
    %cst_48 = arith.constant 0.000000e+00 : f32
    %166 = vector.broadcast %cst_48 : f32 to vector<8x384xf32>
    %167 = arith.maximumf %165, %166 : vector<8x384xf32>
    %cst_49 = arith.constant 5.000000e-01 : f32
    %168 = vector.broadcast %cst_49 : f32 to vector<8x1xf32>
    %169 = arith.mulf %168, %154 : vector<8x1xf32>
    %170 = arith.addf %152, %169 : vector<8x1xf32>
    %171 = vector.broadcast %170 : vector<8x1xf32> to vector<8x384xf32>
    %172 = arith.minimumf %74, %171 : vector<8x384xf32>
    %cst_50 = arith.constant 5.000000e-01 : f32
    %173 = vector.broadcast %cst_50 : f32 to vector<8x1xf32>
    %174 = arith.mulf %173, %154 : vector<8x1xf32>
    %175 = arith.subf %152, %174 : vector<8x1xf32>
    %176 = vector.broadcast %175 : vector<8x1xf32> to vector<8x384xf32>
    %177 = arith.maximumf %71, %176 : vector<8x384xf32>
    %178 = arith.subf %172, %177 : vector<8x384xf32>
    %cst_51 = arith.constant 0.000000e+00 : f32
    %179 = vector.broadcast %cst_51 : f32 to vector<8x384xf32>
    %180 = arith.maximumf %178, %179 : vector<8x384xf32>
    %181 = arith.mulf %167, %180 : vector<8x384xf32>
    %182 = arith.mulf %153, %154 : vector<8x1xf32>
    %183 = vector.broadcast %182 : vector<8x1xf32> to vector<8x384xf32>
    %184 = arith.addf %183, %75 : vector<8x384xf32>
    %185 = arith.subf %184, %181 : vector<8x384xf32>
    %186 = arith.divf %181, %185 : vector<8x384xf32>
    %187 = arith.maximumf %150, %186 : vector<8x384xf32>
    %188 = vector.extract_strided_slice %11 {offsets = [0, 12], sizes = [8, 1], strides = [1, 1]} : vector<8x33xf32> to vector<8x1xf32>
    %189 = vector.extract_strided_slice %11 {offsets = [0, 13], sizes = [8, 1], strides = [1, 1]} : vector<8x33xf32> to vector<8x1xf32>
    %190 = vector.extract_strided_slice %11 {offsets = [0, 14], sizes = [8, 1], strides = [1, 1]} : vector<8x33xf32> to vector<8x1xf32>
    %191 = vector.extract_strided_slice %11 {offsets = [0, 15], sizes = [8, 1], strides = [1, 1]} : vector<8x33xf32> to vector<8x1xf32>
    %cst_52 = arith.constant 5.000000e-01 : f32
    %192 = vector.broadcast %cst_52 : f32 to vector<8x1xf32>
    %193 = arith.mulf %192, %190 : vector<8x1xf32>
    %194 = arith.addf %188, %193 : vector<8x1xf32>
    %195 = vector.broadcast %194 : vector<8x1xf32> to vector<8x384xf32>
    %196 = arith.minimumf %68, %195 : vector<8x384xf32>
    %cst_53 = arith.constant 5.000000e-01 : f32
    %197 = vector.broadcast %cst_53 : f32 to vector<8x1xf32>
    %198 = arith.mulf %197, %190 : vector<8x1xf32>
    %199 = arith.subf %188, %198 : vector<8x1xf32>
    %200 = vector.broadcast %199 : vector<8x1xf32> to vector<8x384xf32>
    %201 = arith.maximumf %65, %200 : vector<8x384xf32>
    %202 = arith.subf %196, %201 : vector<8x384xf32>
    %cst_54 = arith.constant 0.000000e+00 : f32
    %203 = vector.broadcast %cst_54 : f32 to vector<8x384xf32>
    %204 = arith.maximumf %202, %203 : vector<8x384xf32>
    %cst_55 = arith.constant 5.000000e-01 : f32
    %205 = vector.broadcast %cst_55 : f32 to vector<8x1xf32>
    %206 = arith.mulf %205, %191 : vector<8x1xf32>
    %207 = arith.addf %189, %206 : vector<8x1xf32>
    %208 = vector.broadcast %207 : vector<8x1xf32> to vector<8x384xf32>
    %209 = arith.minimumf %74, %208 : vector<8x384xf32>
    %cst_56 = arith.constant 5.000000e-01 : f32
    %210 = vector.broadcast %cst_56 : f32 to vector<8x1xf32>
    %211 = arith.mulf %210, %191 : vector<8x1xf32>
    %212 = arith.subf %189, %211 : vector<8x1xf32>
    %213 = vector.broadcast %212 : vector<8x1xf32> to vector<8x384xf32>
    %214 = arith.maximumf %71, %213 : vector<8x384xf32>
    %215 = arith.subf %209, %214 : vector<8x384xf32>
    %cst_57 = arith.constant 0.000000e+00 : f32
    %216 = vector.broadcast %cst_57 : f32 to vector<8x384xf32>
    %217 = arith.maximumf %215, %216 : vector<8x384xf32>
    %218 = arith.mulf %204, %217 : vector<8x384xf32>
    %219 = arith.mulf %190, %191 : vector<8x1xf32>
    %220 = vector.broadcast %219 : vector<8x1xf32> to vector<8x384xf32>
    %221 = arith.addf %220, %75 : vector<8x384xf32>
    %222 = arith.subf %221, %218 : vector<8x384xf32>
    %223 = arith.divf %218, %222 : vector<8x384xf32>
    %224 = arith.maximumf %187, %223 : vector<8x384xf32>
    %225 = vector.extract_strided_slice %11 {offsets = [0, 16], sizes = [8, 1], strides = [1, 1]} : vector<8x33xf32> to vector<8x1xf32>
    %226 = vector.extract_strided_slice %11 {offsets = [0, 17], sizes = [8, 1], strides = [1, 1]} : vector<8x33xf32> to vector<8x1xf32>
    %227 = vector.extract_strided_slice %11 {offsets = [0, 18], sizes = [8, 1], strides = [1, 1]} : vector<8x33xf32> to vector<8x1xf32>
    %228 = vector.extract_strided_slice %11 {offsets = [0, 19], sizes = [8, 1], strides = [1, 1]} : vector<8x33xf32> to vector<8x1xf32>
    %cst_58 = arith.constant 5.000000e-01 : f32
    %229 = vector.broadcast %cst_58 : f32 to vector<8x1xf32>
    %230 = arith.mulf %229, %227 : vector<8x1xf32>
    %231 = arith.addf %225, %230 : vector<8x1xf32>
    %232 = vector.broadcast %231 : vector<8x1xf32> to vector<8x384xf32>
    %233 = arith.minimumf %68, %232 : vector<8x384xf32>
    %cst_59 = arith.constant 5.000000e-01 : f32
    %234 = vector.broadcast %cst_59 : f32 to vector<8x1xf32>
    %235 = arith.mulf %234, %227 : vector<8x1xf32>
    %236 = arith.subf %225, %235 : vector<8x1xf32>
    %237 = vector.broadcast %236 : vector<8x1xf32> to vector<8x384xf32>
    %238 = arith.maximumf %65, %237 : vector<8x384xf32>
    %239 = arith.subf %233, %238 : vector<8x384xf32>
    %cst_60 = arith.constant 0.000000e+00 : f32
    %240 = vector.broadcast %cst_60 : f32 to vector<8x384xf32>
    %241 = arith.maximumf %239, %240 : vector<8x384xf32>
    %cst_61 = arith.constant 5.000000e-01 : f32
    %242 = vector.broadcast %cst_61 : f32 to vector<8x1xf32>
    %243 = arith.mulf %242, %228 : vector<8x1xf32>
    %244 = arith.addf %226, %243 : vector<8x1xf32>
    %245 = vector.broadcast %244 : vector<8x1xf32> to vector<8x384xf32>
    %246 = arith.minimumf %74, %245 : vector<8x384xf32>
    %cst_62 = arith.constant 5.000000e-01 : f32
    %247 = vector.broadcast %cst_62 : f32 to vector<8x1xf32>
    %248 = arith.mulf %247, %228 : vector<8x1xf32>
    %249 = arith.subf %226, %248 : vector<8x1xf32>
    %250 = vector.broadcast %249 : vector<8x1xf32> to vector<8x384xf32>
    %251 = arith.maximumf %71, %250 : vector<8x384xf32>
    %252 = arith.subf %246, %251 : vector<8x384xf32>
    %cst_63 = arith.constant 0.000000e+00 : f32
    %253 = vector.broadcast %cst_63 : f32 to vector<8x384xf32>
    %254 = arith.maximumf %252, %253 : vector<8x384xf32>
    %255 = arith.mulf %241, %254 : vector<8x384xf32>
    %256 = arith.mulf %227, %228 : vector<8x1xf32>
    %257 = vector.broadcast %256 : vector<8x1xf32> to vector<8x384xf32>
    %258 = arith.addf %257, %75 : vector<8x384xf32>
    %259 = arith.subf %258, %255 : vector<8x384xf32>
    %260 = arith.divf %255, %259 : vector<8x384xf32>
    %261 = arith.maximumf %224, %260 : vector<8x384xf32>
    %262 = vector.extract_strided_slice %11 {offsets = [0, 20], sizes = [8, 1], strides = [1, 1]} : vector<8x33xf32> to vector<8x1xf32>
    %263 = vector.extract_strided_slice %11 {offsets = [0, 21], sizes = [8, 1], strides = [1, 1]} : vector<8x33xf32> to vector<8x1xf32>
    %264 = vector.extract_strided_slice %11 {offsets = [0, 22], sizes = [8, 1], strides = [1, 1]} : vector<8x33xf32> to vector<8x1xf32>
    %265 = vector.extract_strided_slice %11 {offsets = [0, 23], sizes = [8, 1], strides = [1, 1]} : vector<8x33xf32> to vector<8x1xf32>
    %cst_64 = arith.constant 5.000000e-01 : f32
    %266 = vector.broadcast %cst_64 : f32 to vector<8x1xf32>
    %267 = arith.mulf %266, %264 : vector<8x1xf32>
    %268 = arith.addf %262, %267 : vector<8x1xf32>
    %269 = vector.broadcast %268 : vector<8x1xf32> to vector<8x384xf32>
    %270 = arith.minimumf %68, %269 : vector<8x384xf32>
    %cst_65 = arith.constant 5.000000e-01 : f32
    %271 = vector.broadcast %cst_65 : f32 to vector<8x1xf32>
    %272 = arith.mulf %271, %264 : vector<8x1xf32>
    %273 = arith.subf %262, %272 : vector<8x1xf32>
    %274 = vector.broadcast %273 : vector<8x1xf32> to vector<8x384xf32>
    %275 = arith.maximumf %65, %274 : vector<8x384xf32>
    %276 = arith.subf %270, %275 : vector<8x384xf32>
    %cst_66 = arith.constant 0.000000e+00 : f32
    %277 = vector.broadcast %cst_66 : f32 to vector<8x384xf32>
    %278 = arith.maximumf %276, %277 : vector<8x384xf32>
    %cst_67 = arith.constant 5.000000e-01 : f32
    %279 = vector.broadcast %cst_67 : f32 to vector<8x1xf32>
    %280 = arith.mulf %279, %265 : vector<8x1xf32>
    %281 = arith.addf %263, %280 : vector<8x1xf32>
    %282 = vector.broadcast %281 : vector<8x1xf32> to vector<8x384xf32>
    %283 = arith.minimumf %74, %282 : vector<8x384xf32>
    %cst_68 = arith.constant 5.000000e-01 : f32
    %284 = vector.broadcast %cst_68 : f32 to vector<8x1xf32>
    %285 = arith.mulf %284, %265 : vector<8x1xf32>
    %286 = arith.subf %263, %285 : vector<8x1xf32>
    %287 = vector.broadcast %286 : vector<8x1xf32> to vector<8x384xf32>
    %288 = arith.maximumf %71, %287 : vector<8x384xf32>
    %289 = arith.subf %283, %288 : vector<8x384xf32>
    %cst_69 = arith.constant 0.000000e+00 : f32
    %290 = vector.broadcast %cst_69 : f32 to vector<8x384xf32>
    %291 = arith.maximumf %289, %290 : vector<8x384xf32>
    %292 = arith.mulf %278, %291 : vector<8x384xf32>
    %293 = arith.mulf %264, %265 : vector<8x1xf32>
    %294 = vector.broadcast %293 : vector<8x1xf32> to vector<8x384xf32>
    %295 = arith.addf %294, %75 : vector<8x384xf32>
    %296 = arith.subf %295, %292 : vector<8x384xf32>
    %297 = arith.divf %292, %296 : vector<8x384xf32>
    %298 = arith.maximumf %261, %297 : vector<8x384xf32>
    %299 = vector.extract_strided_slice %11 {offsets = [0, 24], sizes = [8, 1], strides = [1, 1]} : vector<8x33xf32> to vector<8x1xf32>
    %300 = vector.extract_strided_slice %11 {offsets = [0, 25], sizes = [8, 1], strides = [1, 1]} : vector<8x33xf32> to vector<8x1xf32>
    %301 = vector.extract_strided_slice %11 {offsets = [0, 26], sizes = [8, 1], strides = [1, 1]} : vector<8x33xf32> to vector<8x1xf32>
    %302 = vector.extract_strided_slice %11 {offsets = [0, 27], sizes = [8, 1], strides = [1, 1]} : vector<8x33xf32> to vector<8x1xf32>
    %cst_70 = arith.constant 5.000000e-01 : f32
    %303 = vector.broadcast %cst_70 : f32 to vector<8x1xf32>
    %304 = arith.mulf %303, %301 : vector<8x1xf32>
    %305 = arith.addf %299, %304 : vector<8x1xf32>
    %306 = vector.broadcast %305 : vector<8x1xf32> to vector<8x384xf32>
    %307 = arith.minimumf %68, %306 : vector<8x384xf32>
    %cst_71 = arith.constant 5.000000e-01 : f32
    %308 = vector.broadcast %cst_71 : f32 to vector<8x1xf32>
    %309 = arith.mulf %308, %301 : vector<8x1xf32>
    %310 = arith.subf %299, %309 : vector<8x1xf32>
    %311 = vector.broadcast %310 : vector<8x1xf32> to vector<8x384xf32>
    %312 = arith.maximumf %65, %311 : vector<8x384xf32>
    %313 = arith.subf %307, %312 : vector<8x384xf32>
    %cst_72 = arith.constant 0.000000e+00 : f32
    %314 = vector.broadcast %cst_72 : f32 to vector<8x384xf32>
    %315 = arith.maximumf %313, %314 : vector<8x384xf32>
    %cst_73 = arith.constant 5.000000e-01 : f32
    %316 = vector.broadcast %cst_73 : f32 to vector<8x1xf32>
    %317 = arith.mulf %316, %302 : vector<8x1xf32>
    %318 = arith.addf %300, %317 : vector<8x1xf32>
    %319 = vector.broadcast %318 : vector<8x1xf32> to vector<8x384xf32>
    %320 = arith.minimumf %74, %319 : vector<8x384xf32>
    %cst_74 = arith.constant 5.000000e-01 : f32
    %321 = vector.broadcast %cst_74 : f32 to vector<8x1xf32>
    %322 = arith.mulf %321, %302 : vector<8x1xf32>
    %323 = arith.subf %300, %322 : vector<8x1xf32>
    %324 = vector.broadcast %323 : vector<8x1xf32> to vector<8x384xf32>
    %325 = arith.maximumf %71, %324 : vector<8x384xf32>
    %326 = arith.subf %320, %325 : vector<8x384xf32>
    %cst_75 = arith.constant 0.000000e+00 : f32
    %327 = vector.broadcast %cst_75 : f32 to vector<8x384xf32>
    %328 = arith.maximumf %326, %327 : vector<8x384xf32>
    %329 = arith.mulf %315, %328 : vector<8x384xf32>
    %330 = arith.mulf %301, %302 : vector<8x1xf32>
    %331 = vector.broadcast %330 : vector<8x1xf32> to vector<8x384xf32>
    %332 = arith.addf %331, %75 : vector<8x384xf32>
    %333 = arith.subf %332, %329 : vector<8x384xf32>
    %334 = arith.divf %329, %333 : vector<8x384xf32>
    %335 = arith.maximumf %298, %334 : vector<8x384xf32>
    %336 = vector.extract_strided_slice %11 {offsets = [0, 28], sizes = [8, 1], strides = [1, 1]} : vector<8x33xf32> to vector<8x1xf32>
    %337 = vector.extract_strided_slice %11 {offsets = [0, 29], sizes = [8, 1], strides = [1, 1]} : vector<8x33xf32> to vector<8x1xf32>
    %338 = vector.extract_strided_slice %11 {offsets = [0, 30], sizes = [8, 1], strides = [1, 1]} : vector<8x33xf32> to vector<8x1xf32>
    %339 = vector.extract_strided_slice %11 {offsets = [0, 31], sizes = [8, 1], strides = [1, 1]} : vector<8x33xf32> to vector<8x1xf32>
    %cst_76 = arith.constant 5.000000e-01 : f32
    %340 = vector.broadcast %cst_76 : f32 to vector<8x1xf32>
    %341 = arith.mulf %340, %338 : vector<8x1xf32>
    %342 = arith.addf %336, %341 : vector<8x1xf32>
    %343 = vector.broadcast %342 : vector<8x1xf32> to vector<8x384xf32>
    %344 = arith.minimumf %68, %343 : vector<8x384xf32>
    %cst_77 = arith.constant 5.000000e-01 : f32
    %345 = vector.broadcast %cst_77 : f32 to vector<8x1xf32>
    %346 = arith.mulf %345, %338 : vector<8x1xf32>
    %347 = arith.subf %336, %346 : vector<8x1xf32>
    %348 = vector.broadcast %347 : vector<8x1xf32> to vector<8x384xf32>
    %349 = arith.maximumf %65, %348 : vector<8x384xf32>
    %350 = arith.subf %344, %349 : vector<8x384xf32>
    %cst_78 = arith.constant 0.000000e+00 : f32
    %351 = vector.broadcast %cst_78 : f32 to vector<8x384xf32>
    %352 = arith.maximumf %350, %351 : vector<8x384xf32>
    %cst_79 = arith.constant 5.000000e-01 : f32
    %353 = vector.broadcast %cst_79 : f32 to vector<8x1xf32>
    %354 = arith.mulf %353, %339 : vector<8x1xf32>
    %355 = arith.addf %337, %354 : vector<8x1xf32>
    %356 = vector.broadcast %355 : vector<8x1xf32> to vector<8x384xf32>
    %357 = arith.minimumf %74, %356 : vector<8x384xf32>
    %cst_80 = arith.constant 5.000000e-01 : f32
    %358 = vector.broadcast %cst_80 : f32 to vector<8x1xf32>
    %359 = arith.mulf %358, %339 : vector<8x1xf32>
    %360 = arith.subf %337, %359 : vector<8x1xf32>
    %361 = vector.broadcast %360 : vector<8x1xf32> to vector<8x384xf32>
    %362 = arith.maximumf %71, %361 : vector<8x384xf32>
    %363 = arith.subf %357, %362 : vector<8x384xf32>
    %cst_81 = arith.constant 0.000000e+00 : f32
    %364 = vector.broadcast %cst_81 : f32 to vector<8x384xf32>
    %365 = arith.maximumf %363, %364 : vector<8x384xf32>
    %366 = arith.mulf %352, %365 : vector<8x384xf32>
    %367 = arith.mulf %338, %339 : vector<8x1xf32>
    %368 = vector.broadcast %367 : vector<8x1xf32> to vector<8x384xf32>
    %369 = arith.addf %368, %75 : vector<8x384xf32>
    %370 = arith.subf %369, %366 : vector<8x384xf32>
    %371 = arith.divf %366, %370 : vector<8x384xf32>
    %372 = arith.maximumf %335, %371 : vector<8x384xf32>
    %373 = vector.extract_strided_slice %11 {offsets = [0, 32], sizes = [8, 1], strides = [1, 1]} : vector<8x33xf32> to vector<8x1xf32>
    %cst_82 = arith.constant 5.000000e-01 : f32
    %374 = vector.broadcast %cst_82 : f32 to vector<8x384xf32>
    %375 = arith.cmpf ogt, %372, %374 : vector<8x384xf32>
    %cst_83 = arith.constant 1.000000e+00 : f32
    %376 = vector.broadcast %cst_83 : f32 to vector<8x384xf32>
    %377 = arith.subf %376, %10 : vector<8x384xf32>
    %378 = vector.broadcast %373 : vector<8x1xf32> to vector<8x384xf32>
    %379 = arith.mulf %378, %377 : vector<8x384xf32>
    %cst_84 = arith.constant 0.000000e+00 : f32
    %380 = vector.broadcast %cst_84 : f32 to vector<8x384xf32>
    %381 = arith.select %375, %380, %379 : vector<8x384xi1>, vector<8x384xf32>
    %382 = arith.negf %9 : vector<8x384xf32>
    %383 = math.exp %382 : vector<8x384xf32>
    %cst_85 = arith.constant 1.000000e+00 : f32
    %384 = vector.broadcast %cst_85 : f32 to vector<8x384xf32>
    %385 = arith.addf %384, %383 : vector<8x384xf32>
    %386 = arith.divf %384, %385 : vector<8x384xf32>
    %cst_86 = arith.constant 1.000000e-07 : f32
    %cst_87 = arith.constant 0.99999988 : f32
    %387 = vector.broadcast %cst_86 : f32 to vector<8x384xf32>
    %388 = arith.maximumf %387, %386 : vector<8x384xf32>
    %389 = vector.broadcast %cst_87 : f32 to vector<8x384xf32>
    %390 = arith.minimumf %389, %388 : vector<8x384xf32>
    %cst_88 = arith.constant 0.000000e+00 : f32
    %391 = vector.broadcast %cst_88 : f32 to vector<8x384xf32>
    %392 = arith.subf %391, %10 : vector<8x384xf32>
    %393 = math.log %390 : vector<8x384xf32>
    %394 = arith.mulf %392, %393 : vector<8x384xf32>
    %cst_89 = arith.constant 1.000000e+00 : f32
    %395 = vector.broadcast %cst_89 : f32 to vector<8x384xf32>
    %396 = arith.subf %395, %10 : vector<8x384xf32>
    %cst_90 = arith.constant 1.000000e+00 : f32
    %397 = vector.broadcast %cst_90 : f32 to vector<8x384xf32>
    %398 = arith.subf %397, %390 : vector<8x384xf32>
    %399 = math.log %398 : vector<8x384xf32>
    %400 = arith.mulf %396, %399 : vector<8x384xf32>
    %401 = arith.subf %394, %400 : vector<8x384xf32>
    %402 = arith.addf %10, %381 : vector<8x384xf32>
    %403 = arith.mulf %401, %402 : vector<8x384xf32>
    %c0_91 = arith.constant 0 : index
    %c0_92 = arith.constant 0 : index
    %404 = vector.load %arg5[%c0_91, %c0_92] : memref<8x384xf32, #tpu.memory_space<vmem>>, vector<8x384xf32>
    tpu.vector_store %arg5[%c0_91, %c0_92], %403 {strides = array<i32>} : memref<8x384xf32, #tpu.memory_space<vmem>>, vector<8x384xf32>,
    return
  }
  func.func @transform_0(%arg0: i32, %arg1: i32) -> (i32, i32) {
    %c0_i32 = arith.constant 0 : i32
    %c0_i32_0 = arith.constant 0 : i32
    return %arg0, %c0_i32 : i32, i32
  }
  func.func @transform_1(%arg0: i32, %arg1: i32) -> (i32, i32, i32) {
    %c0_i32 = arith.constant 0 : i32
    %c0_i32_0 = arith.constant 0 : i32
    return %c0_i32, %arg0, %arg1 : i32, i32, i32
  }
  func.func @transform_2(%arg0: i32, %arg1: i32) -> (i32, i32) {
    %c0_i32 = arith.constant 0 : i32
    return %arg0, %arg1 : i32, i32
  }
  func.func @transform_3(%arg0: i32, %arg1: i32) -> (i32, i32) {
    %c0_i32 = arith.constant 0 : i32
    return %arg0, %arg1 : i32, i32
  }
}

</mosaic_0001>

<llo_original>
// kernel: _conf_loss_device.1
$region0: #{_conf_loss_device.1}
  #allocation0 [shape = 'u32[]', space=smem, size = 0x4, offset = 0x4, fixed_abs, tag = 'smem constant byte address 0x4 - core index']
  #allocation1 [shape = 'u32[144,128]{1,0:T(1,128)}', space=vmem, size = 0x12000, scoped, tag = 'internal scratch']
  %s0 = inlined_call_operand.vmem [shape: f32[8,33], index: 0, kind: input, shape index: {}]
  %s1 = inlined_call_operand.vmem [shape: f32[5,8,768], index: 1, kind: input, shape index: {}]
  %s2 = inlined_call_operand.vmem [shape: f32[8,768], index: 2, kind: input, shape index: {}]
  %s3 = inlined_call_operand.vmem [shape: f32[8,768], index: 3, kind: output, shape index: {}]
  %s4 = sld [smem:[#allocation0]]
  $region68: #{_conf_loss_device.1} parent=0
    _
  %s6 = ssub.s32 1, %s4
  %s7 = scalar_select 0, %s6, %s4
  $region1: #{_conf_loss_device.1} parent=0
    #allocation2 [shape = 'u8[122880]{0}', space=vmem, size = 0x1e000, scoped, tag = 'input window, operand 1']
    loop: start=0, step=1, limit=4
    $region2: #{_conf_loss_device.1} parent=1 // loop_pre_header
      _
    $region3: #{_conf_loss_device.1} parent=1 // loop_header
      %s9 = sphi 0, %s13
      %p10 = scmp.ge.s32.totalorder %s9, 4
      %s16 = sphi 0, %s28
      %s17 = sphi 0, %s24
      %s18 = sphi 0, %s16
      %s19 = sphi 0, %s17
      %s20 = sphi 0, %s18
      %s21 = sphi 0, %s19
      %s31 = sphi 0, %s33
      %s34 = sphi 0, %s31
      %s35 = sphi 0, %s34
      %s51 = sphi 0, %s35
      %s59 = sphi 0, %s61
      %s62 = sphi 0, %s59
      %s63 = sphi 0, %s62
      %s79 = sphi 0, %s63
      %s87 = sphi 0, %s89
      %s90 = sphi 0, %s87
      %s91 = sphi 0, %s90
      %s107 = sphi 0, %s91
      %s115 = sphi 0, %s117
      %s118 = sphi 0, %s115
      %s119 = sphi 0, %s118
      %s135 = sphi 0, %s119
    $region4: #{_conf_loss_device.1} parent=1 // loop_header_branch
      %12 = sbr.rel (%p10) target = $region8
    $region5: #{_conf_loss_device.1} parent=1 // loop_body
      %s14 = ssub.s32 %s9, 1
      %s15 = ssub.s32 %s9, 2
      %s22 = sadd.s32 1, %s17
      %p23 = scmp.ge.s32.totalorder %s22, 2
      %s24 = scalar_select %p23, 0, %s22
      %s25 = sadd.s32 1, %s16
      %s26 = scalar_select %p23, %s25, %s16
      %p27 = scmp.ge.s32.totalorder %s26, 1
      %s28 = scalar_select %p27, 0, %s26
      %s29 = ssub.s32 %s16, %s28
      %p30 = scmp.eq.s32.totalorder %s29, 0
      %s32 = sadd.s32 %s31, 1
      %s33 = scalar_select %p30, %s31, %s32
      %p36 = pneg %p30
      %p37 = scmp.eq.s32.totalorder %s9, 1
      %p38 = por %p36, %p37
      %p39 = scmp.ne.s32.totalorder %s31, %s34
      %p40 = scmp.eq.s32.totalorder %s9, 0
      %p41 = por %p39, %p40
      %p42 = scmp.ne.s32.totalorder %s31, %s34
      %p43 = scmp.eq.s32.totalorder %s14, 1
      %p44 = por %p42, %p43
      %p45 = scmp.ne.s32.totalorder %s34, %s35
      %p46 = scmp.eq.s32.totalorder %s14, 0
      %p47 = por %p45, %p46
      %p48 = scmp.ne.s32.totalorder %s34, %s35
      %p49 = scmp.eq.s32.totalorder %s15, 1
      %p50 = por %p48, %p49
      %p52 = scmp.ne.s32.totalorder %s35, %s51
      %p53 = scmp.eq.s32.totalorder %s15, 0
      %p54 = por %p52, %p53
      %s55 = ssub.s32 %s16, %s28
      %s56 = ssub.s32 %s17, %s24
      %s57 = sor.u32 %s55, %s56
      %p58 = scmp.eq.s32.totalorder %s57, 0
      %s60 = sadd.s32 %s59, 1
      %s61 = scalar_select %p58, %s59, %s60
      %p64 = pneg %p58
      %p65 = scmp.eq.s32.totalorder %s9, 1
      %p66 = por %p64, %p65
      %p67 = scmp.ne.s32.totalorder %s59, %s62
      %p68 = scmp.eq.s32.totalorder %s9, 0
      %p69 = por %p67, %p68
      %p70 = scmp.ne.s32.totalorder %s59, %s62
      %p71 = scmp.eq.s32.totalorder %s14, 1
      %p72 = por %p70, %p71
      %p73 = scmp.ne.s32.totalorder %s62, %s63
      %p74 = scmp.eq.s32.totalorder %s14, 0
      %p75 = por %p73, %p74
      %p76 = scmp.ne.s32.totalorder %s62, %s63
      %p77 = scmp.eq.s32.totalorder %s15, 1
      %p78 = por %p76, %p77
      %p80 = scmp.ne.s32.totalorder %s63, %s79
      %p81 = scmp.eq.s32.totalorder %s15, 0
      %p82 = por %p80, %p81
      %s83 = ssub.s32 %s16, %s28
      %s84 = ssub.s32 %s17, %s24
      %s85 = sor.u32 %s83, %s84
      %p86 = scmp.eq.s32.totalorder %s85, 0
      %s88 = sadd.s32 %s87, 1
      %s89 = scalar_select %p86, %s87, %s88
      %p92 = pneg %p86
      %p93 = scmp.eq.s32.totalorder %s9, 1
      %p94 = por %p92, %p93
      %p95 = scmp.ne.s32.totalorder %s87, %s90
      %p96 = scmp.eq.s32.totalorder %s9, 0
      %p97 = por %p95, %p96
      %p98 = scmp.ne.s32.totalorder %s87, %s90
      %p99 = scmp.eq.s32.totalorder %s14, 1
      %p100 = por %p98, %p99
      %p101 = scmp.ne.s32.totalorder %s90, %s91
      %p102 = scmp.eq.s32.totalorder %s14, 0
      %p103 = por %p101, %p102
      %p104 = scmp.ne.s32.totalorder %s90, %s91
      %p105 = scmp.eq.s32.totalorder %s15, 1
      %p106 = por %p104, %p105
      %p108 = scmp.ne.s32.totalorder %s91, %s107
      %p109 = scmp.eq.s32.totalorder %s15, 0
      %p110 = por %p108, %p109
      %s111 = ssub.s32 %s16, %s28
      %s112 = ssub.s32 %s17, %s24
      %s113 = sor.u32 %s111, %s112
      %p114 = scmp.eq.s32.totalorder %s113, 0
      %s116 = sadd.s32 %s115, 1
      %s117 = scalar_select %p114, %s115, %s116
      %p120 = pneg %p114
      %p121 = scmp.eq.s32.totalorder %s9, 1
      %p122 = por %p120, %p121
      %p123 = scmp.ne.s32.totalorder %s115, %s118
      %p124 = scmp.eq.s32.totalorder %s9, 0
      %p125 = por %p123, %p124
      %p126 = scmp.ne.s32.totalorder %s115, %s118
      %p127 = scmp.eq.s32.totalorder %s14, 1
      %p128 = por %p126, %p127
      %p129 = scmp.ne.s32.totalorder %s118, %s119
      %p130 = scmp.eq.s32.totalorder %s14, 0
      %p131 = por %p129, %p130
      %p132 = scmp.ne.s32.totalorder %s118, %s119
      %p133 = scmp.eq.s32.totalorder %s15, 1
      %p134 = por %p132, %p133
      %p136 = scmp.ne.s32.totalorder %s119, %s135
      %p137 = scmp.eq.s32.totalorder %s15, 0
      %p138 = por %p136, %p137
      %p139 = scmp.le.s32.totalorder 1, %s9
      %p140 = scmp.lt.s32.totalorder %s9, 3
      %p141 = pnand %p139, %p140
      %p142 = pneg %p141
      // Predicated region
      $region9: #{_conf_loss_device.1} parent=5 // pred_check
        _
      $region10: #{_conf_loss_device.1} parent=5 // pred_check_branch
        %144 = sbr.rel (%p141) target = $region12
      $region11: #{_conf_loss_device.1} parent=5 // pred_region
        %s145 = ssub.s32 %s9, 1
        // Predicated region
        $region13: #{_conf_loss_device.1} parent=11 // pred_check
          %p146 = pneg %p47
        $region14: #{_conf_loss_device.1} parent=11 // pred_check_branch
          %148 = sbr.rel (%p146) target = $region16
        $region15: #{_conf_loss_device.1} parent=11 // pred_region
          %p149 = scmp.lt.s32.totalorder %s18, 0
          %s150 = scalar_select %p149, %s18, 0
          %s151 = smul.addr %s150, 8
          %s152 = scalar_lea.vmem %s0, %s151
        $region16: #{_conf_loss_device.1} parent=11 // pred_fallthru
          _
      $region12: #{_conf_loss_device.1} parent=5 // pred_fallthru
        _
      %p153 = scmp.lt.s32.totalorder %s9, 2
      // Predicated region
      $region17: #{_conf_loss_device.1} parent=5 // pred_check
        %p154 = pneg %p153
      $region18: #{_conf_loss_device.1} parent=5 // pred_check_branch
        %156 = sbr.rel (%p154) target = $region20
      $region19: #{_conf_loss_device.1} parent=5 // pred_region
        // Predicated region
        $region21: #{_conf_loss_device.1} parent=19 // pred_check
          %p157 = pneg %p69
        $region22: #{_conf_loss_device.1} parent=19 // pred_check_branch
          %159 = sbr.rel (%p157) target = $region24
        $region23: #{_conf_loss_device.1} parent=19 // pred_region
          %s160 = sand.u32 %s59, 1
          %s161 = sand.u32 %s59, 1
          %s162 = smul.addr %s161, 120
          %s163 = scalar_lea.vmem [#allocation2], %s162
          %s164 = smul.u32 3, %s17
          %s165 = smul.addr %s16, 6
          %s166 = sadd.s32 %s164, %s165
          %s167 = smul.addr %s166, 8
          %s168 = scalar_lea.vmem %s1, %s167
          // Predicated region
          $region25: #{_conf_loss_device.1} parent=23 // pred_check
            _
          $region26: #{_conf_loss_device.1} parent=23 // pred_check_branch
            %170 = sbr.rel (0) target = $region28
          $region27: #{_conf_loss_device.1} parent=23 // pred_region
            // Predicated region
            $region29: #{_conf_loss_device.1} parent=27 // pred_check
              _
            $region30: #{_conf_loss_device.1} parent=27 // pred_check_branch
              %172 = sbr.rel (0) target = $region32
            $region31: #{_conf_loss_device.1} parent=27 // pred_region
              loop: start=0, step=1, limit=1
              $region33: #{_conf_loss_device.1} parent=31 // loop_pre_header
                _
              $region34: #{_conf_loss_device.1} parent=31 // loop_header
                %s174 = sphi 0, %s178
                %p175 = scmp.ge.s32.totalorder %s174, 1
                %s179 = sphi %s168, %s168
                %s180 = sphi %s163, %s163
              $region35: #{_conf_loss_device.1} parent=31 // loop_header_branch
                %177 = sbr.rel (%p175) target = $region39
              $region36: #{_conf_loss_device.1} parent=31 // loop_body
                %v181 = vld [vmem:[%s179] sm:$0xff]
                %182 = vst [vmem:[%s180] sm:$0xff] %v181
                %v183 = vld [vmem:[%s179 + $0x8] sm:$0xff]
                %184 = vst [vmem:[%s180 + $0x8] sm:$0xff] %v183
                %v185 = vld [vmem:[%s179 + $0x10] sm:$0xff]
                %186 = vst [vmem:[%s180 + $0x10] sm:$0xff] %v185
                %v187 = vld [vmem:[%s179 + $0x30] sm:$0xff]
                %188 = vst [vmem:[%s180 + $0x18] sm:$0xff] %v187
                %v189 = vld [vmem:[%s179 + $0x38] sm:$0xff]
                %190 = vst [vmem:[%s180 + $0x20] sm:$0xff] %v189
                %v191 = vld [vmem:[%s179 + $0x40] sm:$0xff]
                %192 = vst [vmem:[%s180 + $0x28] sm:$0xff] %v191
                %v193 = vld [vmem:[%s179 + $0x60] sm:$0xff]
                %194 = vst [vmem:[%s180 + $0x30] sm:$0xff] %v193
                %v195 = vld [vmem:[%s179 + $0x68] sm:$0xff]
                %196 = vst [vmem:[%s180 + $0x38] sm:$0xff] %v195
                %v197 = vld [vmem:[%s179 + $0x70] sm:$0xff]
                %198 = vst [vmem:[%s180 + $0x40] sm:$0xff] %v197
                %v199 = vld [vmem:[%s179 + $0x90] sm:$0xff]
                %200 = vst [vmem:[%s180 + $0x48] sm:$0xff] %v199
                %v201 = vld [vmem:[%s179 + $0x98] sm:$0xff]
                %202 = vst [vmem:[%s180 + $0x50] sm:$0xff] %v201
                %v203 = vld [vmem:[%s179 + $0xa0] sm:$0xff]
                %204 = vst [vmem:[%s180 + $0x58] sm:$0xff] %v203
                %v205 = vld [vmem:[%s179 + $0xc0] sm:$0xff]
                %206 = vst [vmem:[%s180 + $0x60] sm:$0xff] %v205
                %v207 = vld [vmem:[%s179 + $0xc8] sm:$0xff]
                %208 = vst [vmem:[%s180 + $0x68] sm:$0xff] %v207
                %v209 = vld [vmem:[%s179 + $0xd0] sm:$0xff]
                %210 = vst [vmem:[%s180 + $0x70] sm:$0xff] %v209
              $region37: #{_conf_loss_device.1} parent=31 // loop_footer
                %s178 = sadd.s32 1, %s174
              $region38: #{_conf_loss_device.1} parent=31 // loop_footer_branch
                %173 = sbr.rel target = $region34
              $region39: #{_conf_loss_device.1} parent=31 // loop_exit
                _
            $region32: #{_conf_loss_device.1} parent=27 // pred_fallthru
              _
            // Predicated region
            $region40: #{_conf_loss_device.1} parent=27 // pred_check
              _
            $region41: #{_conf_loss_device.1} parent=27 // pred_check_branch
              %212 = sbr.rel target = $region43
            $region42: #{_conf_loss_device.1} parent=27 // pred_region
              _
            $region43: #{_conf_loss_device.1} parent=27 // pred_fallthru
              _
          $region28: #{_conf_loss_device.1} parent=23 // pred_fallthru
            _
          %213 = vnop
        $region24: #{_conf_loss_device.1} parent=19 // pred_fallthru
          _
        // Predicated region
        $region44: #{_conf_loss_device.1} parent=19 // pred_check
          %p214 = pneg %p97
        $region45: #{_conf_loss_device.1} parent=19 // pred_check_branch
          %216 = sbr.rel (%p214) target = $region47
        $region46: #{_conf_loss_device.1} parent=19 // pred_region
          %s217 = smul.u32 3, %s17
          %p218 = scmp.lt.s32.totalorder %s16, 0
          %s219 = scalar_select %p218, %s16, 0
          %p220 = scmp.lt.s32.totalorder %s217, 5
          %s221 = scalar_select %p220, %s217, 5
          %s222 = smul.addr %s219, 6
          %s223 = sadd.s32 %s221, %s222
          %s224 = smul.addr %s223, 8
          %s225 = scalar_lea.vmem %s2, %s224
          %s226 = smul.u32 3, %s17
        $region47: #{_conf_loss_device.1} parent=19 // pred_fallthru
          _
      $region20: #{_conf_loss_device.1} parent=5 // pred_fallthru
        _
      %p227 = scmp.le.s32.totalorder 1, %s9
      %p228 = scmp.lt.s32.totalorder %s9, 3
      %p229 = pnand %p227, %p228
      %p230 = pneg %p229
      // Predicated region
      $region48: #{_conf_loss_device.1} parent=5 // pred_check
        _
      $region49: #{_conf_loss_device.1} parent=5 // pred_check_branch
        %232 = sbr.rel (%p229) target = $region51
      $region50: #{_conf_loss_device.1} parent=5 // pred_region
        %s233 = ssub.s32 %s9, 1
        %s234 = sand.u32 %s62, 1
        %s235 = sand.u32 %s62, 1
        %s236 = smul.addr %s235, 120
        %s237 = scalar_lea.vmem [#allocation2], %s236
        // Predicated region
        $region52: #{_conf_loss_device.1} parent=50 // pred_check
          %p238 = pneg %p75
        $region53: #{_conf_loss_device.1} parent=50 // pred_check_branch
          %240 = sbr.rel (%p238) target = $region55
        $region54: #{_conf_loss_device.1} parent=50 // pred_region
          _
        $region55: #{_conf_loss_device.1} parent=50 // pred_fallthru
          _
        %p241 = scmp.lt.s32.totalorder %s18, 0
        %s242 = scalar_select %p241, %s18, 0
        %s243 = smul.addr %s242, 8
        %s244 = scalar_lea.vmem %s0, %s243
        %p245 = pneg %p47
        %p246 = pneg %p44
        %s247 = sand.u32 %s62, 1
        %s248 = sand.u32 %s62, 1
        %s249 = smul.addr %s248, 120
        %s250 = scalar_lea.vmem [#allocation2], %s249
        %p251 = pneg %p75
        %p252 = pneg %p72
        %s253 = smul.u32 3, %s19
        %p254 = scmp.lt.s32.totalorder %s18, 0
        %s255 = scalar_select %p254, %s18, 0
        %p256 = scmp.lt.s32.totalorder %s253, 5
        %s257 = scalar_select %p256, %s253, 5
        %s258 = smul.addr %s255, 6
        %s259 = sadd.s32 %s257, %s258
        %s260 = smul.addr %s259, 8
        %s261 = scalar_lea.vmem %s2, %s260
        %p262 = pneg %p103
        %p263 = pneg %p100
        %p264 = pneg %p131
        %p265 = pneg %p128
        %s266 = smul.u32 3, %s19
        %p267 = scmp.lt.s32.totalorder %s18, 0
        %s268 = scalar_select %p267, %s18, 0
        %p269 = scmp.lt.s32.totalorder %s266, 5
        %s270 = scalar_select %p269, %s266, 5
        %s271 = smul.addr %s268, 6
        %s272 = sadd.s32 %s270, %s271
        %s273 = smul.addr %s272, 8
        %s274 = scalar_lea.vmem %s3, %s273
        %p275 = scmp.lt.s32.totalorder %s18, 0
        %s276 = scalar_select %p275, %s18, 0
        %s277 = smul.addr %s276, 8
        %s278 = scalar_lea.vmem %s0, %s277
        %s279 = smul.u32 3, %s19
        %s280 = smul.u32 3, %s19
        %p281 = scmp.lt.s32.totalorder %s18, 0
        %s282 = scalar_select %p281, %s18, 0
        %p283 = scmp.lt.s32.totalorder %s280, 5
        %s284 = scalar_select %p283, %s280, 5
        %s285 = smul.addr %s282, 6
        %s286 = sadd.s32 %s284, %s285
        %s287 = smul.addr %s286, 8
        %s288 = scalar_lea.vmem %s2, %s287
        %s289 = smul.u32 3, %s19
        %s290 = smul.u32 3, %s19
        %p291 = scmp.lt.s32.totalorder %s18, 0
        %s292 = scalar_select %p291, %s18, 0
        %p293 = scmp.lt.s32.totalorder %s290, 5
        %s294 = scalar_select %p293, %s290, 5
        %s295 = smul.addr %s292, 6
        %s296 = sadd.s32 %s294, %s295
        %s297 = smul.addr %s296, 8
        %s298 = scalar_lea.vmem %s3, %s297
        %s299 = smul.u32 3, %s19
        %v300 = vld [vmem:[%s237] sm:$0xff]
        %v301 = vld [vmem:[%s237 + $0x8] sm:$0xff]
        %v302 = vld [vmem:[%s237 + $0x10] sm:$0xff]
        %s303 = scalar_lea.vmem %s237, 24 [#allocation2]
        %v304 = vld [vmem:[%s303] sm:$0xff]
        %v305 = vld [vmem:[%s303 + $0x8] sm:$0xff]
        %v306 = vld [vmem:[%s303 + $0x10] sm:$0xff]
        %s307 = scalar_lea.vmem %s237, 48 [#allocation2]
        %v308 = vld [vmem:[%s307] sm:$0xff]
        %v309 = vld [vmem:[%s307 + $0x8] sm:$0xff]
        %v310 = vld [vmem:[%s307 + $0x10] sm:$0xff]
        %s311 = scalar_lea.vmem %s237, 72 [#allocation2]
        %v312 = vld [vmem:[%s311] sm:$0xff]
        %v313 = vld [vmem:[%s311 + $0x8] sm:$0xff]
        %v314 = vld [vmem:[%s311 + $0x10] sm:$0xff]
        %s315 = scalar_lea.vmem %s237, 96 [#allocation2]
        %v316 = vld [vmem:[%s315] sm:$0xff]
        %v317 = vld [vmem:[%s315 + $0x8] sm:$0xff]
        %v318 = vld [vmem:[%s315 + $0x10] sm:$0xff]
        %v319 = vld [vmem:[%s288] sm:$0xff]
        %v320 = vld [vmem:[%s288 + $0x8] sm:$0xff]
        %v321 = vld [vmem:[%s288 + $0x10] sm:$0xff]
        %v322 = vld [vmem:[%s278] sm:$0xff]
        %s323 = smul.u32 %s19, 384
        %v324 = vlaneseq
        %v325 = vand.u32 %v324, 127
        %v326 = vadd.s32 %v325, 128
        %v327 = vadd.s32 %v325, 256
        %v328 = vstv %s323
        %v329 = vadd.s32 %v328, %v325
        %v330 = vadd.s32 %v328, %v326
        %v331 = vadd.s32 %v328, %v327
        %v332 = vcvt.s32.f32 %v329
        %v333 = vcvt.s32.f32 %v330
        %v334 = vcvt.s32.f32 %v331
        %v335 = vmul.f32 %v332, 0.00390625
        %v336 = vmul.f32 %v333, 0.00390625
        %v337 = vmul.f32 %v334, 0.00390625
        %v338 = vfloor.f32 %v335
        %v339 = vfloor.f32 %v336
        %v340 = vfloor.f32 %v337
        %v341 = vmul.f32 %v338, 256.0
        %v342 = vmul.f32 %v339, 256.0
        %v343 = vmul.f32 %v340, 256.0
        %v344 = vsub.f32 %v332, %v341
        %v345 = vsub.f32 %v333, %v342
        %v346 = vsub.f32 %v334, %v343
        %v347 = vmul.f32 %v344, 0.0625
        %v348 = vmul.f32 %v345, 0.0625
        %v349 = vmul.f32 %v346, 0.0625
        %v350 = vfloor.f32 %v347
        %v351 = vfloor.f32 %v348
        %v352 = vfloor.f32 %v349
        %v353 = vmul.f32 %v350, 16.0
        %v354 = vmul.f32 %v351, 16.0
        %v355 = vmul.f32 %v352, 16.0
        %v356 = vsub.f32 %v344, %v353
        %v357 = vsub.f32 %v345, %v354
        %v358 = vsub.f32 %v346, %v355
        %vm359 = vcmp.eq.f32.partialorder %v338, 1.0
        %vm360 = vcmp.eq.f32.partialorder %v339, 1.0
        %vm361 = vcmp.eq.f32.partialorder %v340, 1.0
        %v362 = vsel %vm359, 3.875, 3.6875
        %v363 = vsel %vm360, 3.875, 3.6875
        %v364 = vsel %vm361, 3.875, 3.6875
        %v365 = vsel %vm359, 2.8125, 7.4375
        %v366 = vsel %vm360, 2.8125, 7.4375
        %v367 = vsel %vm361, 2.8125, 7.4375
        %vm368 = vcmp.eq.f32.partialorder %v338, 0.0
        %vm369 = vcmp.eq.f32.partialorder %v339, 0.0
        %vm370 = vcmp.eq.f32.partialorder %v340, 0.0
        %v371 = vsel %vm368, 1.875, %v362
        %v372 = vsel %vm369, 1.875, %v363
        %v373 = vsel %vm370, 1.875, %v364
        %v374 = vsel %vm368, 3.8125, %v365
        %v375 = vsel %vm369, 3.8125, %v366
        %v376 = vsel %vm370, 3.8125, %v367
        %v377 = vxor.u32 %v300, 2147483648
        %v378 = vxor.u32 %v301, 2147483648
        %v379 = vxor.u32 %v302, 2147483648
        %v380 = vmul.f32 %v377, 1.442695
        %v381 = vpow.pop %v380
        %v382 = vmul.f32 %v378, 1.442695
        %v383 = vpow.pop %v382
        %v384 = vmul.f32 %v379, 1.442695
        %v385 = vpow.pop %v384
        %v386 = vadd.f32 %v381, 1.0
        %v387 = vadd.f32 %v383, 1.0
        %v388 = vadd.f32 %v385, 1.0
        %v389 = vrcp.pop %v386
        %v390 = vmul.f32 1.0, %v389
        %v391 = vrcp.pop %v387
        %v392 = vmul.f32 1.0, %v391
        %v393 = vrcp.pop %v388
        %v394 = vmul.f32 1.0, %v393
        %v395 = vadd.f32 %v390, %v356
        %v396 = vadd.f32 %v392, %v357
        %v397 = vadd.f32 %v394, %v358
        %v398 = vxor.u32 %v304, 2147483648
        %v399 = vxor.u32 %v305, 2147483648
        %v400 = vxor.u32 %v306, 2147483648
        %v401 = vmul.f32 %v398, 1.442695
        %v402 = vpow.pop %v401
        %v403 = vmul.f32 %v399, 1.442695
        %v404 = vpow.pop %v403
        %v405 = vmul.f32 %v400, 1.442695
        %v406 = vpow.pop %v405
        %v407 = vadd.f32 %v402, 1.0
        %v408 = vadd.f32 %v404, 1.0
        %v409 = vadd.f32 %v406, 1.0
        %v410 = vrcp.pop %v407
        %v411 = vmul.f32 1.0, %v410
        %v412 = vrcp.pop %v408
        %v413 = vmul.f32 1.0, %v412
        %v414 = vrcp.pop %v409
        %v415 = vmul.f32 1.0, %v414
        %v416 = vadd.f32 %v411, %v350
        %v417 = vadd.f32 %v413, %v351
        %v418 = vadd.f32 %v415, %v352
        %v419 = vmul.f32 %v308, 1.442695
        %v420 = vpow.pop %v419
        %v421 = vmul.f32 %v309, 1.442695
        %v422 = vpow.pop %v421
        %v423 = vmul.f32 %v310, 1.442695
        %v424 = vpow.pop %v423
        %v425 = vmul.f32 %v420, %v371
        %v426 = vmul.f32 %v422, %v372
        %v427 = vmul.f32 %v424, %v373
        %v428 = vmul.f32 %v312, 1.442695
        %v429 = vpow.pop %v428
        %v430 = vmul.f32 %v313, 1.442695
        %v431 = vpow.pop %v430
        %v432 = vmul.f32 %v314, 1.442695
        %v433 = vpow.pop %v432
        %v434 = vmul.f32 %v429, %v374
        %v435 = vmul.f32 %v431, %v375
        %v436 = vmul.f32 %v433, %v376
        %v437 = vmul.f32 %v425, 0.5
        %v438 = vmul.f32 %v426, 0.5
        %v439 = vmul.f32 %v427, 0.5
        %v440 = vsub.f32 %v395, %v437
        %v441 = vsub.f32 %v396, %v438
        %v442 = vsub.f32 %v397, %v439
        %v443 = vadd.f32 %v395, %v437
        %v444 = vadd.f32 %v396, %v438
        %v445 = vadd.f32 %v397, %v439
        %v446 = vmul.f32 %v434, 0.5
        %v447 = vmul.f32 %v435, 0.5
        %v448 = vmul.f32 %v436, 0.5
        %v449 = vsub.f32 %v416, %v446
        %v450 = vsub.f32 %v417, %v447
        %v451 = vsub.f32 %v418, %v448
        %v452 = vadd.f32 %v416, %v446
        %v453 = vadd.f32 %v417, %v447
        %v454 = vadd.f32 %v418, %v448
        %v455 = vmul.f32 %v425, %v434
        %v456 = vmul.f32 %v426, %v435
        %v457 = vmul.f32 %v427, %v436
        %v458 = vmul.f32 %v322, 0.5
        %460 = vrot.lane.b32.xlu0 %v458, 126
        %v461 = vpop.permute.xlu0 %460
        %v463 = vadd.f32 %v322, %v461
        %465 = vset.pattern.permute.xlu0 0
        %466 = vperm.xlu0 %465, %v463
        %v467 = vpop.permute.xlu0 %466
        %v469 = vmin.f32 %v443, %v467
        %v470 = vmin.f32 %v444, %v467
        %v471 = vmin.f32 %v445, %v467
        %v472 = vsub.f32 %v322, %v461
        %474 = vset.pattern.permute.xlu0 0
        %475 = vperm.xlu0 %474, %v472
        %v476 = vpop.permute.xlu0 %475
        %v478 = vmax.f32 %v440, %v476
        %v479 = vmax.f32 %v441, %v476
        %v480 = vmax.f32 %v442, %v476
        %v481 = vsub.f32 %v469, %v478
        %v482 = vsub.f32 %v470, %v479
        %v483 = vsub.f32 %v471, %v480
        %v484 = vmax.f32 %v481, 0.0
        %v485 = vmax.f32 %v482, 0.0
        %v486 = vmax.f32 %v483, 0.0
        %487 = vset.pattern.permute.xlu0 1
        %488 = vperm.xlu0 %487, %v463
        %v489 = vpop.permute.xlu0 %488
        %v491 = vmin.f32 %v452, %v489
        %v492 = vmin.f32 %v453, %v489
        %v493 = vmin.f32 %v454, %v489
        %494 = vset.pattern.permute.xlu0 1
        %495 = vperm.xlu0 %494, %v472
        %v496 = vpop.permute.xlu0 %495
        %v498 = vmax.f32 %v449, %v496
        %v499 = vmax.f32 %v450, %v496
        %v500 = vmax.f32 %v451, %v496
        %v501 = vsub.f32 %v491, %v498
        %v502 = vsub.f32 %v492, %v499
        %v503 = vsub.f32 %v493, %v500
        %v504 = vmax.f32 %v501, 0.0
        %v505 = vmax.f32 %v502, 0.0
        %v506 = vmax.f32 %v503, 0.0
        %v507 = vmul.f32 %v484, %v504
        %v508 = vmul.f32 %v485, %v505
        %v509 = vmul.f32 %v486, %v506
        %511 = vrot.lane.b32.xlu0 %v322, 127
        %v512 = vpop.permute.xlu0 %511
        %v514 = vmul.f32 %v322, %v512
        %516 = vset.pattern.permute.xlu0 2
        %517 = vperm.xlu0 %516, %v514
        %v518 = vpop.permute.xlu0 %517
        %v520 = vadd.f32 %v518, %v455
        %v521 = vadd.f32 %v518, %v456
        %v522 = vadd.f32 %v518, %v457
        %v523 = vsub.f32 %v520, %v507
        %v524 = vsub.f32 %v521, %v508
        %v525 = vsub.f32 %v522, %v509
        %v526 = vrcp.pop %v523
        %v527 = vmul.f32 %v507, %v526
        %v528 = vrcp.pop %v524
        %v529 = vmul.f32 %v508, %v528
        %v530 = vrcp.pop %v525
        %v531 = vmul.f32 %v509, %v530
        %v532 = vmax.f32 %v527, 0.0
        %v533 = vmax.f32 %v529, 0.0
        %v534 = vmax.f32 %v531, 0.0
        %535 = vset.pattern.permute.xlu0 4
        %536 = vperm.xlu0 %535, %v463
        %v537 = vpop.permute.xlu0 %536
        %v539 = vmin.f32 %v443, %v537
        %v540 = vmin.f32 %v444, %v537
        %v541 = vmin.f32 %v445, %v537
        %542 = vset.pattern.permute.xlu0 4
        %543 = vperm.xlu0 %542, %v472
        %v544 = vpop.permute.xlu0 %543
        %v546 = vmax.f32 %v440, %v544
        %v547 = vmax.f32 %v441, %v544
        %v548 = vmax.f32 %v442, %v544
        %v549 = vsub.f32 %v539, %v546
        %v550 = vsub.f32 %v540, %v547
        %v551 = vsub.f32 %v541, %v548
        %v552 = vmax.f32 %v549, 0.0
        %v553 = vmax.f32 %v550, 0.0
        %v554 = vmax.f32 %v551, 0.0
        %555 = vset.pattern.permute.xlu0 5
        %556 = vperm.xlu0 %555, %v463
        %v557 = vpop.permute.xlu0 %556
        %v559 = vmin.f32 %v452, %v557
        %v560 = vmin.f32 %v453, %v557
        %v561 = vmin.f32 %v454, %v557
        %562 = vset.pattern.permute.xlu0 5
        %563 = vperm.xlu0 %562, %v472
        %v564 = vpop.permute.xlu0 %563
        %v566 = vmax.f32 %v449, %v564
        %v567 = vmax.f32 %v450, %v564
        %v568 = vmax.f32 %v451, %v564
        %v569 = vsub.f32 %v559, %v566
        %v570 = vsub.f32 %v560, %v567
        %v571 = vsub.f32 %v561, %v568
        %v572 = vmax.f32 %v569, 0.0
        %v573 = vmax.f32 %v570, 0.0
        %v574 = vmax.f32 %v571, 0.0
        %v575 = vmul.f32 %v552, %v572
        %v576 = vmul.f32 %v553, %v573
        %v577 = vmul.f32 %v554, %v574
        %578 = vset.pattern.permute.xlu0 6
        %579 = vperm.xlu0 %578, %v514
        %v580 = vpop.permute.xlu0 %579
        %v582 = vadd.f32 %v580, %v455
        %v583 = vadd.f32 %v580, %v456
        %v584 = vadd.f32 %v580, %v457
        %v585 = vsub.f32 %v582, %v575
        %v586 = vsub.f32 %v583, %v576
        %v587 = vsub.f32 %v584, %v577
        %v588 = vrcp.pop %v585
        %v589 = vmul.f32 %v575, %v588
        %v590 = vrcp.pop %v586
        %v591 = vmul.f32 %v576, %v590
        %v592 = vrcp.pop %v587
        %v593 = vmul.f32 %v577, %v592
        %v594 = vmax.f32 %v532, %v589
        %v595 = vmax.f32 %v533, %v591
        %v596 = vmax.f32 %v534, %v593
        %597 = vset.pattern.permute.xlu0 8
        %598 = vperm.xlu0 %597, %v463
        %v599 = vpop.permute.xlu0 %598
        %v601 = vmin.f32 %v443, %v599
        %v602 = vmin.f32 %v444, %v599
        %v603 = vmin.f32 %v445, %v599
        %604 = vset.pattern.permute.xlu0 8
        %605 = vperm.xlu0 %604, %v472
        %v606 = vpop.permute.xlu0 %605
        %v608 = vmax.f32 %v440, %v606
        %v609 = vmax.f32 %v441, %v606
        %v610 = vmax.f32 %v442, %v606
        %v611 = vsub.f32 %v601, %v608
        %v612 = vsub.f32 %v602, %v609
        %v613 = vsub.f32 %v603, %v610
        %v614 = vmax.f32 %v611, 0.0
        %v615 = vmax.f32 %v612, 0.0
        %v616 = vmax.f32 %v613, 0.0
        %617 = vset.pattern.permute.xlu0 9
        %618 = vperm.xlu0 %617, %v463
        %v619 = vpop.permute.xlu0 %618
        %v621 = vmin.f32 %v452, %v619
        %v622 = vmin.f32 %v453, %v619
        %v623 = vmin.f32 %v454, %v619
        %624 = vset.pattern.permute.xlu0 9
        %625 = vperm.xlu0 %624, %v472
        %v626 = vpop.permute.xlu0 %625
        %v628 = vmax.f32 %v449, %v626
        %v629 = vmax.f32 %v450, %v626
        %v630 = vmax.f32 %v451, %v626
        %v631 = vsub.f32 %v621, %v628
        %v632 = vsub.f32 %v622, %v629
        %v633 = vsub.f32 %v623, %v630
        %v634 = vmax.f32 %v631, 0.0
        %v635 = vmax.f32 %v632, 0.0
        %v636 = vmax.f32 %v633, 0.0
        %v637 = vmul.f32 %v614, %v634
        %v638 = vmul.f32 %v615, %v635
        %v639 = vmul.f32 %v616, %v636
        %640 = vset.pattern.permute.xlu0 10
        %641 = vperm.xlu0 %640, %v514
        %v642 = vpop.permute.xlu0 %641
        %v644 = vadd.f32 %v642, %v455
        %v645 = vadd.f32 %v642, %v456
        %v646 = vadd.f32 %v642, %v457
        %v647 = vsub.f32 %v644, %v637
        %v648 = vsub.f32 %v645, %v638
        %v649 = vsub.f32 %v646, %v639
        %v650 = vrcp.pop %v647
        %v651 = vmul.f32 %v637, %v650
        %v652 = vrcp.pop %v648
        %v653 = vmul.f32 %v638, %v652
        %v654 = vrcp.pop %v649
        %v655 = vmul.f32 %v639, %v654
        %v656 = vmax.f32 %v594, %v651
        %v657 = vmax.f32 %v595, %v653
        %v658 = vmax.f32 %v596, %v655
        %659 = vset.pattern.permute.xlu0 12
        %660 = vperm.xlu0 %659, %v463
        %v661 = vpop.permute.xlu0 %660
        %v663 = vmin.f32 %v443, %v661
        %v664 = vmin.f32 %v444, %v661
        %v665 = vmin.f32 %v445, %v661
        %666 = vset.pattern.permute.xlu0 12
        %667 = vperm.xlu0 %666, %v472
        %v668 = vpop.permute.xlu0 %667
        %v670 = vmax.f32 %v440, %v668
        %v671 = vmax.f32 %v441, %v668
        %v672 = vmax.f32 %v442, %v668
        %v673 = vsub.f32 %v663, %v670
        %v674 = vsub.f32 %v664, %v671
        %v675 = vsub.f32 %v665, %v672
        %v676 = vmax.f32 %v673, 0.0
        %v677 = vmax.f32 %v674, 0.0
        %v678 = vmax.f32 %v675, 0.0
        %679 = vset.pattern.permute.xlu0 13
        %680 = vperm.xlu0 %679, %v463
        %v681 = vpop.permute.xlu0 %680
        %v683 = vmin.f32 %v452, %v681
        %v684 = vmin.f32 %v453, %v681
        %v685 = vmin.f32 %v454, %v681
        %686 = vset.pattern.permute.xlu0 13
        %687 = vperm.xlu0 %686, %v472
        %v688 = vpop.permute.xlu0 %687
        %v690 = vmax.f32 %v449, %v688
        %v691 = vmax.f32 %v450, %v688
        %v692 = vmax.f32 %v451, %v688
        %v693 = vsub.f32 %v683, %v690
        %v694 = vsub.f32 %v684, %v691
        %v695 = vsub.f32 %v685, %v692
        %v696 = vmax.f32 %v693, 0.0
        %v697 = vmax.f32 %v694, 0.0
        %v698 = vmax.f32 %v695, 0.0
        %v699 = vmul.f32 %v676, %v696
        %v700 = vmul.f32 %v677, %v697
        %v701 = vmul.f32 %v678, %v698
        %702 = vset.pattern.permute.xlu0 14
        %703 = vperm.xlu0 %702, %v514
        %v704 = vpop.permute.xlu0 %703
        %v706 = vadd.f32 %v704, %v455
        %v707 = vadd.f32 %v704, %v456
        %v708 = vadd.f32 %v704, %v457
        %v709 = vsub.f32 %v706, %v699
        %v710 = vsub.f32 %v707, %v700
        %v711 = vsub.f32 %v708, %v701
        %v712 = vrcp.pop %v709
        %v713 = vmul.f32 %v699, %v712
        %v714 = vrcp.pop %v710
        %v715 = vmul.f32 %v700, %v714
        %v716 = vrcp.pop %v711
        %v717 = vmul.f32 %v701, %v716
        %v718 = vmax.f32 %v656, %v713
        %v719 = vmax.f32 %v657, %v715
        %v720 = vmax.f32 %v658, %v717
        %721 = vset.pattern.permute.xlu0 16
        %722 = vperm.xlu0 %721, %v463
        %v723 = vpop.permute.xlu0 %722
        %v725 = vmin.f32 %v443, %v723
        %v726 = vmin.f32 %v444, %v723
        %v727 = vmin.f32 %v445, %v723
        %728 = vset.pattern.permute.xlu0 16
        %729 = vperm.xlu0 %728, %v472
        %v730 = vpop.permute.xlu0 %729
        %v732 = vmax.f32 %v440, %v730
        %v733 = vmax.f32 %v441, %v730
        %v734 = vmax.f32 %v442, %v730
        %v735 = vsub.f32 %v725, %v732
        %v736 = vsub.f32 %v726, %v733
        %v737 = vsub.f32 %v727, %v734
        %v738 = vmax.f32 %v735, 0.0
        %v739 = vmax.f32 %v736, 0.0
        %v740 = vmax.f32 %v737, 0.0
        %741 = vset.pattern.permute.xlu0 17
        %742 = vperm.xlu0 %741, %v463
        %v743 = vpop.permute.xlu0 %742
        %v745 = vmin.f32 %v452, %v743
        %v746 = vmin.f32 %v453, %v743
        %v747 = vmin.f32 %v454, %v743
        %748 = vset.pattern.permute.xlu0 17
        %749 = vperm.xlu0 %748, %v472
        %v750 = vpop.permute.xlu0 %749
        %v752 = vmax.f32 %v449, %v750
        %v753 = vmax.f32 %v450, %v750
        %v754 = vmax.f32 %v451, %v750
        %v755 = vsub.f32 %v745, %v752
        %v756 = vsub.f32 %v746, %v753
        %v757 = vsub.f32 %v747, %v754
        %v758 = vmax.f32 %v755, 0.0
        %v759 = vmax.f32 %v756, 0.0
        %v760 = vmax.f32 %v757, 0.0
        %v761 = vmul.f32 %v738, %v758
        %v762 = vmul.f32 %v739, %v759
        %v763 = vmul.f32 %v740, %v760
        %764 = vset.pattern.permute.xlu0 18
        %765 = vperm.xlu0 %764, %v514
        %v766 = vpop.permute.xlu0 %765
        %v768 = vadd.f32 %v766, %v455
        %v769 = vadd.f32 %v766, %v456
        %v770 = vadd.f32 %v766, %v457
        %v771 = vsub.f32 %v768, %v761
        %v772 = vsub.f32 %v769, %v762
        %v773 = vsub.f32 %v770, %v763
        %v774 = vrcp.pop %v771
        %v775 = vmul.f32 %v761, %v774
        %v776 = vrcp.pop %v772
        %v777 = vmul.f32 %v762, %v776
        %v778 = vrcp.pop %v773
        %v779 = vmul.f32 %v763, %v778
        %v780 = vmax.f32 %v718, %v775
        %v781 = vmax.f32 %v719, %v777
        %v782 = vmax.f32 %v720, %v779
        %783 = vset.pattern.permute.xlu0 20
        %784 = vperm.xlu0 %783, %v463
        %v785 = vpop.permute.xlu0 %784
        %v787 = vmin.f32 %v443, %v785
        %v788 = vmin.f32 %v444, %v785
        %v789 = vmin.f32 %v445, %v785
        %790 = vset.pattern.permute.xlu0 20
        %791 = vperm.xlu0 %790, %v472
        %v792 = vpop.permute.xlu0 %791
        %v794 = vmax.f32 %v440, %v792
        %v795 = vmax.f32 %v441, %v792
        %v796 = vmax.f32 %v442, %v792
        %v797 = vsub.f32 %v787, %v794
        %v798 = vsub.f32 %v788, %v795
        %v799 = vsub.f32 %v789, %v796
        %v800 = vmax.f32 %v797, 0.0
        %v801 = vmax.f32 %v798, 0.0
        %v802 = vmax.f32 %v799, 0.0
        %803 = vset.pattern.permute.xlu0 21
        %804 = vperm.xlu0 %803, %v463
        %v805 = vpop.permute.xlu0 %804
        %v807 = vmin.f32 %v452, %v805
        %v808 = vmin.f32 %v453, %v805
        %v809 = vmin.f32 %v454, %v805
        %810 = vset.pattern.permute.xlu0 21
        %811 = vperm.xlu0 %810, %v472
        %v812 = vpop.permute.xlu0 %811
        %v814 = vmax.f32 %v449, %v812
        %v815 = vmax.f32 %v450, %v812
        %v816 = vmax.f32 %v451, %v812
        %v817 = vsub.f32 %v807, %v814
        %v818 = vsub.f32 %v808, %v815
        %v819 = vsub.f32 %v809, %v816
        %v820 = vmax.f32 %v817, 0.0
        %v821 = vmax.f32 %v818, 0.0
        %v822 = vmax.f32 %v819, 0.0
        %v823 = vmul.f32 %v800, %v820
        %v824 = vmul.f32 %v801, %v821
        %v825 = vmul.f32 %v802, %v822
        %826 = vset.pattern.permute.xlu0 22
        %827 = vperm.xlu0 %826, %v514
        %v828 = vpop.permute.xlu0 %827
        %v830 = vadd.f32 %v828, %v455
        %v831 = vadd.f32 %v828, %v456
        %v832 = vadd.f32 %v828, %v457
        %v833 = vsub.f32 %v830, %v823
        %v834 = vsub.f32 %v831, %v824
        %v835 = vsub.f32 %v832, %v825
        %v836 = vrcp.pop %v833
        %v837 = vmul.f32 %v823, %v836
        %v838 = vrcp.pop %v834
        %v839 = vmul.f32 %v824, %v838
        %v840 = vrcp.pop %v835
        %v841 = vmul.f32 %v825, %v840
        %v842 = vmax.f32 %v780, %v837
        %v843 = vmax.f32 %v781, %v839
        %v844 = vmax.f32 %v782, %v841
        %845 = vset.pattern.permute.xlu0 24
        %846 = vperm.xlu0 %845, %v463
        %v847 = vpop.permute.xlu0 %846
        %v849 = vmin.f32 %v443, %v847
        %v850 = vmin.f32 %v444, %v847
        %v851 = vmin.f32 %v445, %v847
        %852 = vset.pattern.permute.xlu0 24
        %853 = vperm.xlu0 %852, %v472
        %v854 = vpop.permute.xlu0 %853
        %v856 = vmax.f32 %v440, %v854
        %v857 = vmax.f32 %v441, %v854
        %v858 = vmax.f32 %v442, %v854
        %v859 = vsub.f32 %v849, %v856
        %v860 = vsub.f32 %v850, %v857
        %v861 = vsub.f32 %v851, %v858
        %v862 = vmax.f32 %v859, 0.0
        %v863 = vmax.f32 %v860, 0.0
        %v864 = vmax.f32 %v861, 0.0
        %865 = vset.pattern.permute.xlu0 25
        %866 = vperm.xlu0 %865, %v463
        %v867 = vpop.permute.xlu0 %866
        %v869 = vmin.f32 %v452, %v867
        %v870 = vmin.f32 %v453, %v867
        %v871 = vmin.f32 %v454, %v867
        %872 = vset.pattern.permute.xlu0 25
        %873 = vperm.xlu0 %872, %v472
        %v874 = vpop.permute.xlu0 %873
        %v876 = vmax.f32 %v449, %v874
        %v877 = vmax.f32 %v450, %v874
        %v878 = vmax.f32 %v451, %v874
        %v879 = vsub.f32 %v869, %v876
        %v880 = vsub.f32 %v870, %v877
        %v881 = vsub.f32 %v871, %v878
        %v882 = vmax.f32 %v879, 0.0
        %v883 = vmax.f32 %v880, 0.0
        %v884 = vmax.f32 %v881, 0.0
        %v885 = vmul.f32 %v862, %v882
        %v886 = vmul.f32 %v863, %v883
        %v887 = vmul.f32 %v864, %v884
        %888 = vset.pattern.permute.xlu0 26
        %889 = vperm.xlu0 %888, %v514
        %v890 = vpop.permute.xlu0 %889
        %v892 = vadd.f32 %v890, %v455
        %v893 = vadd.f32 %v890, %v456
        %v894 = vadd.f32 %v890, %v457
        %v895 = vsub.f32 %v892, %v885
        %v896 = vsub.f32 %v893, %v886
        %v897 = vsub.f32 %v894, %v887
        %v898 = vrcp.pop %v895
        %v899 = vmul.f32 %v885, %v898
        %v900 = vrcp.pop %v896
        %v901 = vmul.f32 %v886, %v900
        %v902 = vrcp.pop %v897
        %v903 = vmul.f32 %v887, %v902
        %v904 = vmax.f32 %v842, %v899
        %v905 = vmax.f32 %v843, %v901
        %v906 = vmax.f32 %v844, %v903
        %907 = vset.pattern.permute.xlu0 28
        %908 = vperm.xlu0 %907, %v463
        %v909 = vpop.permute.xlu0 %908
        %v911 = vmin.f32 %v443, %v909
        %v912 = vmin.f32 %v444, %v909
        %v913 = vmin.f32 %v445, %v909
        %914 = vset.pattern.permute.xlu0 28
        %915 = vperm.xlu0 %914, %v472
        %v916 = vpop.permute.xlu0 %915
        %v918 = vmax.f32 %v440, %v916
        %v919 = vmax.f32 %v441, %v916
        %v920 = vmax.f32 %v442, %v916
        %v921 = vsub.f32 %v911, %v918
        %v922 = vsub.f32 %v912, %v919
        %v923 = vsub.f32 %v913, %v920
        %v924 = vmax.f32 %v921, 0.0
        %v925 = vmax.f32 %v922, 0.0
        %v926 = vmax.f32 %v923, 0.0
        %927 = vset.pattern.permute.xlu0 29
        %928 = vperm.xlu0 %927, %v463
        %v929 = vpop.permute.xlu0 %928
        %v931 = vmin.f32 %v452, %v929
        %v932 = vmin.f32 %v453, %v929
        %v933 = vmin.f32 %v454, %v929
        %934 = vset.pattern.permute.xlu0 29
        %935 = vperm.xlu0 %934, %v472
        %v936 = vpop.permute.xlu0 %935
        %v938 = vmax.f32 %v449, %v936
        %v939 = vmax.f32 %v450, %v936
        %v940 = vmax.f32 %v451, %v936
        %v941 = vsub.f32 %v931, %v938
        %v942 = vsub.f32 %v932, %v939
        %v943 = vsub.f32 %v933, %v940
        %v944 = vmax.f32 %v941, 0.0
        %v945 = vmax.f32 %v942, 0.0
        %v946 = vmax.f32 %v943, 0.0
        %v947 = vmul.f32 %v924, %v944
        %v948 = vmul.f32 %v925, %v945
        %v949 = vmul.f32 %v926, %v946
        %950 = vset.pattern.permute.xlu0 30
        %951 = vperm.xlu0 %950, %v514
        %v952 = vpop.permute.xlu0 %951
        %v954 = vadd.f32 %v952, %v455
        %v955 = vadd.f32 %v952, %v456
        %v956 = vadd.f32 %v952, %v457
        %v957 = vsub.f32 %v954, %v947
        %v958 = vsub.f32 %v955, %v948
        %v959 = vsub.f32 %v956, %v949
        %v960 = vrcp.pop %v957
        %v961 = vmul.f32 %v947, %v960
        %v962 = vrcp.pop %v958
        %v963 = vmul.f32 %v948, %v962
        %v964 = vrcp.pop %v959
        %v965 = vmul.f32 %v949, %v964
        %v966 = vmax.f32 %v904, %v961
        %v967 = vmax.f32 %v905, %v963
        %v968 = vmax.f32 %v906, %v965
        %vm969 = vcmp.gt.f32.partialorder %v966, 0.5
        %vm970 = vcmp.gt.f32.partialorder %v967, 0.5
        %vm971 = vcmp.gt.f32.partialorder %v968, 0.5
        %v972 = vsub.f32 1.0, %v319
        %v973 = vsub.f32 1.0, %v320
        %v974 = vsub.f32 1.0, %v321
        %975 = vset.pattern.permute.xlu0 32
        %976 = vperm.xlu0 %975, %v322
        %v977 = vpop.permute.xlu0 %976
        %v979 = vmul.f32 %v977, %v972
        %v980 = vmul.f32 %v977, %v973
        %v981 = vmul.f32 %v977, %v974
        %v982 = vsel %vm969, 0.0, %v979
        %v983 = vsel %vm970, 0.0, %v980
        %v984 = vsel %vm971, 0.0, %v981
        %v985 = vxor.u32 %v316, 2147483648
        %v986 = vxor.u32 %v317, 2147483648
        %v987 = vxor.u32 %v318, 2147483648
        %v988 = vmul.f32 %v985, 1.442695
        %v989 = vpow.pop %v988
        %v990 = vmul.f32 %v986, 1.442695
        %v991 = vpow.pop %v990
        %v992 = vmul.f32 %v987, 1.442695
        %v993 = vpow.pop %v992
        %v994 = vadd.f32 %v989, 1.0
        %v995 = vadd.f32 %v991, 1.0
        %v996 = vadd.f32 %v993, 1.0
        %v997 = vrcp.pop %v994
        %v998 = vmul.f32 1.0, %v997
        %v999 = vrcp.pop %v995
        %v1000 = vmul.f32 1.0, %v999
        %v1001 = vrcp.pop %v996
        %v1002 = vmul.f32 1.0, %v1001
        %v1003 = vmax.f32 %v998, 1e-07
        %v1004 = vmax.f32 %v1000, 1e-07
        %v1005 = vmax.f32 %v1002, 1e-07
        %v1006 = vmin.f32 %v1003, 0.9999999
        %v1007 = vmin.f32 %v1004, 0.9999999
        %v1008 = vmin.f32 %v1005, 0.9999999
        %v1009 = vsub.f32 0.0, %v319
        %v1010 = vsub.f32 0.0, %v320
        %v1011 = vsub.f32 0.0, %v321
        %v1012 = vlog2.pop %v1006
        %v1013 = vmul.f32 %v1012, 0.6931472
        %v1014 = vlog2.pop %v1007
        %v1015 = vmul.f32 %v1014, 0.6931472
        %v1016 = vlog2.pop %v1008
        %v1017 = vmul.f32 %v1016, 0.6931472
        %v1018 = vmul.f32 %v1009, %v1013
        %v1019 = vmul.f32 %v1010, %v1015
        %v1020 = vmul.f32 %v1011, %v1017
        %v1021 = vsub.f32 1.0, %v1006
        %v1022 = vsub.f32 1.0, %v1007
        %v1023 = vsub.f32 1.0, %v1008
        %v1024 = vlog2.pop %v1021
        %v1025 = vmul.f32 %v1024, 0.6931472
        %v1026 = vlog2.pop %v1022
        %v1027 = vmul.f32 %v1026, 0.6931472
        %v1028 = vlog2.pop %v1023
        %v1029 = vmul.f32 %v1028, 0.6931472
        %v1030 = vmul.f32 %v972, %v1025
        %v1031 = vmul.f32 %v973, %v1027
        %v1032 = vmul.f32 %v974, %v1029
        %v1033 = vsub.f32 %v1018, %v1030
        %v1034 = vsub.f32 %v1019, %v1031
        %v1035 = vsub.f32 %v1020, %v1032
        %v1036 = vadd.f32 %v319, %v982
        %v1037 = vadd.f32 %v320, %v983
        %v1038 = vadd.f32 %v321, %v984
        %v1039 = vmul.f32 %v1033, %v1036
        %v1040 = vmul.f32 %v1034, %v1037
        %v1041 = vmul.f32 %v1035, %v1038
        %1042 = vst [vmem:[%s298] sm:$0xff] %v1039
        %1043 = vst [vmem:[%s298 + $0x8] sm:$0xff] %v1040
        %1044 = vst [vmem:[%s298 + $0x10] sm:$0xff] %v1041
        %s1045 = smul.u32 3, %s19
        %p1046 = scmp.lt.s32.totalorder %s18, 0
        %s1047 = scalar_select %p1046, %s18, 0
        %p1048 = scmp.lt.s32.totalorder %s1045, 5
        %s1049 = scalar_select %p1048, %s1045, 5
        %s1050 = smul.addr %s1047, 6
        %s1051 = sadd.s32 %s1049, %s1050
        %s1052 = smul.addr %s1051, 8
        %s1053 = scalar_lea.vmem %s3, %s1052
        // Predicated region
        $region56: #{_conf_loss_device.1} parent=50 // pred_check
          %p1054 = pneg %p128
        $region57: #{_conf_loss_device.1} parent=50 // pred_check_branch
          %1056 = sbr.rel (%p1054) target = $region59
        $region58: #{_conf_loss_device.1} parent=50 // pred_region
          %s1057 = smul.u32 3, %s19
        $region59: #{_conf_loss_device.1} parent=50 // pred_fallthru
          _
      $region51: #{_conf_loss_device.1} parent=5 // pred_fallthru
        _
      %p1058 = scmp.le.s32.totalorder 2, %s9
      // Predicated region
      $region60: #{_conf_loss_device.1} parent=5 // pred_check
        %p1059 = pneg %p1058
      $region61: #{_conf_loss_device.1} parent=5 // pred_check_branch
        %1061 = sbr.rel (%p1059) target = $region63
      $region62: #{_conf_loss_device.1} parent=5 // pred_region
        %s1062 = ssub.s32 %s9, 2
        // Predicated region
        $region64: #{_conf_loss_device.1} parent=62 // pred_check
          %p1063 = pneg %p134
        $region65: #{_conf_loss_device.1} parent=62 // pred_check_branch
          %1065 = sbr.rel (%p1063) target = $region67
        $region66: #{_conf_loss_device.1} parent=62 // pred_region
          %s1066 = smul.u32 3, %s21
          %p1067 = scmp.lt.s32.totalorder %s20, 0
          %s1068 = scalar_select %p1067, %s20, 0
          %p1069 = scmp.lt.s32.totalorder %s1066, 5
          %s1070 = scalar_select %p1069, %s1066, 5
          %s1071 = smul.addr %s1068, 6
          %s1072 = sadd.s32 %s1070, %s1071
          %s1073 = smul.addr %s1072, 8
          %s1074 = scalar_lea.vmem %s3, %s1073
        $region67: #{_conf_loss_device.1} parent=62 // pred_fallthru
          _
      $region63: #{_conf_loss_device.1} parent=5 // pred_fallthru
        _
    $region6: #{_conf_loss_device.1} parent=1 // loop_footer
      %s13 = sadd.s32 1, %s9
    $region7: #{_conf_loss_device.1} parent=1 // loop_footer_branch
      %8 = sbr.rel target = $region3
    $region8: #{_conf_loss_device.1} parent=1 // loop_exit
      _

</llo_original>
